<compile_context>
chip_gen: v7x
topology: tpu7x:2x2x1
jax: 0.10.0
libtpu: 0.0.40
codegen_flags: <defaults>
</compile_context>

<pallas_src>
import jax
import jax.numpy as jnp
import numpy as np
from jax.experimental import pallas as pl
from jax.experimental.pallas import tpu as pltpu


def _round_up(x, m):
    return (x + m - 1) // m * m


# ---------------------------------------------------------------------------
# Tiled fused matmul + bias kernel:  out = x @ w + b
# Used for the hoisted LSTM input projection and for the decoder linear.
# ---------------------------------------------------------------------------

def _matmul_bias_kernel(x_ref, w_ref, b_ref, o_ref):
    o_ref[...] = (jnp.dot(x_ref[...], w_ref[...],
                          preferred_element_type=jnp.float32)
                  + b_ref[...]).astype(o_ref.dtype)


def matmul_bias(x, w, b):
    """x: (M, K), w: (K, N), b: (1, N)  ->  (M, N) float32.

    Pads N up to a multiple of 128 (lane-dense stores) and M up to a multiple
    of 8 (sublane); tiles over (M, N) with K unblocked (weights streamed per
    N-tile, double-buffered by the BlockSpec pipeline).
    """
    M, K = x.shape
    K2, N = w.shape
    assert K == K2

    N_pad = _round_up(N, 128)
    if N_pad != N:
        w = jnp.pad(w, ((0, 0), (0, N_pad - N)))
        b = jnp.pad(b, ((0, 0), (0, N_pad - N)))
    tn = N_pad if N_pad <= 512 else 128

    if M <= 256:
        M_pad = _round_up(M, 8)
        tm = M_pad
    else:
        M_pad = _round_up(M, 128)
        tm = 128
    if M_pad != M:
        x = jnp.pad(x, ((0, M_pad - M), (0, 0)))

    out = pl.pallas_call(
        _matmul_bias_kernel,
        out_shape=jax.ShapeDtypeStruct((M_pad, N_pad), jnp.float32),
        grid=(M_pad // tm, N_pad // tn),
        in_specs=[
            pl.BlockSpec((tm, K), lambda i, j: (i, 0)),
            pl.BlockSpec((K, tn), lambda i, j: (0, j)),
            pl.BlockSpec((1, tn), lambda i, j: (0, j)),
        ],
        out_specs=pl.BlockSpec((tm, tn), lambda i, j: (i, j)),
        compiler_params=pltpu.CompilerParams(
            dimension_semantics=("parallel", "parallel")),
    )(x, w, b)
    return out[:M, :N]


# ---------------------------------------------------------------------------
# LSTM recurrence kernel (one layer).  The input projection (x @ Wih + b) is
# already folded into x_proj; the serial loop only does h @ Whh + elementwise.
# Single invocation (no grid): x_proj, Whh and y stay resident in VMEM.
# ---------------------------------------------------------------------------

def _lstm_recurrence_kernel(xp_ref, h0_ref, c0_ref, whh_ref,
                            y_ref, hT_ref, cT_ref):
    T = xp_ref.shape[0]
    H = h0_ref.shape[-1]
    whh = whh_ref[...]                       # (H, 4H) resident weight

    def step(t, carry):
        h_prev, c_prev = carry
        gates = xp_ref[t] + jnp.dot(h_prev, whh,
                                    preferred_element_type=jnp.float32)
        i_g = jax.nn.sigmoid(gates[:, 0 * H:1 * H])
        f_g = jax.nn.sigmoid(gates[:, 1 * H:2 * H])
        g_g = jnp.tanh(gates[:, 2 * H:3 * H])
        o_g = jax.nn.sigmoid(gates[:, 3 * H:4 * H])
        c_new = f_g * c_prev + i_g * g_g
        h_new = o_g * jnp.tanh(c_new)
        y_ref[t] = h_new
        return (h_new, c_new)

    h_fin, c_fin = jax.lax.fori_loop(
        0, T, step, (h0_ref[...], c0_ref[...]), unroll=(T <= 32))
    # Final states written exactly once, after the loop.
    hT_ref[...] = h_fin
    cT_ref[...] = c_fin


def lstm_recurrence(x_proj, h0, c0, whh):
    T, B, _ = x_proj.shape
    H = whh.shape[0]
    out_shape = (
        jax.ShapeDtypeStruct((T, B, H), jnp.float32),
        jax.ShapeDtypeStruct((B, H), jnp.float32),
        jax.ShapeDtypeStruct((B, H), jnp.float32),
    )
    # TODO(synk): for long T / large H, block time into VMEM-sized chunks and
    # tile Whh's 4H axis (v7x has only 64 MiB VMEM); fine at these sizes.
    return pl.pallas_call(
        _lstm_recurrence_kernel,
        out_shape=out_shape,
    )(x_proj, h0, c0, whh)


# ---------------------------------------------------------------------------
# Parameter setup (deterministic, mirrors RNNModel.__init__ / init_weights)
# ---------------------------------------------------------------------------

def init_params(key, n_token, n_input, n_hidden, n_layers):
    init_range = 0.1
    keys = jax.random.split(key, 2 + 4 * n_layers)
    dec_w = jax.random.uniform(keys[1], (n_token, n_hidden), jnp.float32,
                               -init_range, init_range)
    params = {
        "emb": jax.random.uniform(keys[0], (n_token, n_input), jnp.float32,
                                  -init_range, init_range),
        # transpose / reshape done once here, not per forward call
        "dec_w_t": dec_w.T,                              # (H, V)
        "dec_b": jnp.zeros((1, n_token), jnp.float32),   # (1, V)
    }
    k = 1.0 / np.sqrt(n_hidden)  # PyTorch default LSTM init range
    layers = []
    for l in range(n_layers):
        in_size = n_input if l == 0 else n_hidden
        kw = keys[2 + 4 * l: 2 + 4 * (l + 1)]
        w_ih = jax.random.uniform(kw[0], (4 * n_hidden, in_size), jnp.float32, -k, k)
        w_hh = jax.random.uniform(kw[1], (4 * n_hidden, n_hidden), jnp.float32, -k, k)
        b_ih = jax.random.uniform(kw[2], (4 * n_hidden,), jnp.float32, -k, k)
        b_hh = jax.random.uniform(kw[3], (4 * n_hidden,), jnp.float32, -k, k)
        # fused gate layout (i,f,g,o along the 4H axis), pre-transposed for x @ W
        wih_f = w_ih.T                                   # (I, 4H)
        whh_f = w_hh.T                                   # (H, 4H)
        b_f = (b_ih + b_hh).reshape(1, 4 * n_hidden)     # (1, 4H)
        layers.append((wih_f, whh_f, b_f))
    params["layers"] = layers
    return params


# ---------------------------------------------------------------------------
# Forward pass (== RNNModel.forward with rnn_type='LSTM', eval-mode dropout)
# ---------------------------------------------------------------------------

def rnn_model_forward(params, tokens, hidden):
    h0, c0 = hidden
    T, B = tokens.shape
    # embedding lookup: memory gather, kept in plain JAX glue
    x = jnp.take(params["emb"], tokens, axis=0)          # (T, B, n_input)
    # TODO(synk): nn.Dropout(p=0.5) is identity in eval mode; training-mode
    # stochastic dropout is not implemented here.

    # pad batch to a sublane multiple (8); padded rows are discarded at the end
    B_pad = _round_up(max(B, 8), 8)
    pad_b = B_pad - B
    if pad_b:
        x = jnp.pad(x, ((0, 0), (0, pad_b), (0, 0)))
        h = jnp.pad(h0, ((0, 0), (0, pad_b), (0, 0)))
        c = jnp.pad(c0, ((0, 0), (0, pad_b), (0, 0)))
    else:
        h, c = h0, c0

    h_fin, c_fin = [], []
    for l, (wih_f, whh_f, b_f) in enumerate(params["layers"]):
        I = x.shape[-1]
        H = whh_f.shape[0]
        # Hoisted input projection: one big GEMM over all timesteps.
        xp = matmul_bias(x.reshape(T * B_pad, I), wih_f, b_f)
        xp = xp.reshape(T, B_pad, 4 * H)
        x, hT, cT = lstm_recurrence(xp, h[l], c[l], whh_f)
        h_fin.append(hT)
        c_fin.append(cT)

    H = x.shape[-1]
    V = params["dec_w_t"].shape[1]
    decoded = matmul_bias(x.reshape(T * B_pad, H),
                          params["dec_w_t"], params["dec_b"])
    decoded = decoded.reshape(T, B_pad, V)[:, :B, :]
    hT = jnp.stack(h_fin)[:, :B, :]
    cT = jnp.stack(c_fin)[:, :B, :]
    return decoded, (hT, cT)


# ---------------------------------------------------------------------------
# Pure-JAX reference (for correctness check)
# ---------------------------------------------------------------------------

def _lstm_layer_ref(x, h0, c0, wih_f, whh_f, b_f):
    H = whh_f.shape[0]

    def step(carry, x_t):
        h, c = carry
        g = x_t @ wih_f + h @ whh_f + b_f
        i_g = jax.nn.sigmoid(g[:, 0 * H:1 * H])
        f_g = jax.nn.sigmoid(g[:, 1 * H:2 * H])
        g_g = jnp.tanh(g[:, 2 * H:3 * H])
        o_g = jax.nn.sigmoid(g[:, 3 * H:4 * H])
        c = f_g * c + i_g * g_g
        h = o_g * jnp.tanh(c)
        return (h, c), h

    (hT, cT), ys = jax.lax.scan(step, (h0, c0), x)
    return ys, hT, cT


def rnn_model_forward_ref(params, tokens, hidden):
    h0, c0 = hidden
    T, B = tokens.shape
    x = jnp.take(params["emb"], tokens, axis=0)
    h_fin, c_fin = [], []
    for l, (wih_f, whh_f, b_f) in enumerate(params["layers"]):
        x, hT, cT = _lstm_layer_ref(x, h0[l], c0[l], wih_f, whh_f, b_f)
        h_fin.append(hT)
        c_fin.append(cT)
    H = x.shape[-1]
    V = params["dec_w_t"].shape[1]
    decoded = x.reshape(T * B, H) @ params["dec_w_t"] + params["dec_b"]
    return decoded.reshape(T, B, V), (jnp.stack(h_fin), jnp.stack(c_fin))


# ---------------------------------------------------------------------------

if __name__ == "__main__":
    n_token, n_input, n_hidden, n_layers = 50, 32, 32, 2
    T, B = 8, 4

    key = jax.random.PRNGKey(0)
    pkey, tkey = jax.random.split(key)
    params = init_params(pkey, n_token, n_input, n_hidden, n_layers)
    tokens = jax.random.randint(tkey, (T, B), 0, n_token, dtype=jnp.int32)
    hidden = (jnp.zeros((n_layers, B, n_hidden), jnp.float32),
              jnp.zeros((n_layers, B, n_hidden), jnp.float32))

    decoded, (hT, cT) = jax.jit(rnn_model_forward)(params, tokens, hidden)
    jax.block_until_ready((decoded, hT, cT))

    dec_ref, (hT_ref, cT_ref) = rnn_model_forward_ref(params, tokens, hidden)

    assert decoded.shape == (T, B, n_token)
    assert hT.shape == (n_layers, B, n_hidden)
    assert cT.shape == (n_layers, B, n_hidden)
    np.testing.assert_allclose(np.asarray(decoded), np.asarray(dec_ref),
                               rtol=2e-3, atol=2e-3)
    np.testing.assert_allclose(np.asarray(hT), np.asarray(hT_ref),
                               rtol=2e-3, atol=2e-3)
    np.testing.assert_allclose(np.asarray(cT), np.asarray(cT_ref),
                               rtol=2e-3, atol=2e-3)

    print("KERNEL_OK")
</pallas_src>

<mosaic_0001>
module attributes {stable_mosaic.version = 11 : i64} {
  func.func @_lstm_recurrence_kernel(%arg0: memref<8x8x128xf32, #tpu.memory_space<vmem>>, %arg1: memref<8x32xf32, #tpu.memory_space<vmem>>, %arg2: memref<8x32xf32, #tpu.memory_space<vmem>>, %arg3: memref<32x128xf32, #tpu.memory_space<vmem>>, %arg4: memref<8x8x32xf32, #tpu.memory_space<vmem>>, %arg5: memref<8x32xf32, #tpu.memory_space<vmem>>, %arg6: memref<8x32xf32, #tpu.memory_space<vmem>>) attributes {dimension_semantics = [], scalar_prefetch = 0 : i64, scratch_operands = 0 : i64, tpu.core_type = #tpu.core_type<tc>} {
    %c0 = arith.constant 0 : index
    %c0_0 = arith.constant 0 : index
    %0 = vector.load %arg3[%c0, %c0_0] : memref<32x128xf32, #tpu.memory_space<vmem>>, vector<32x128xf32>
    %c0_1 = arith.constant 0 : index
    %c0_2 = arith.constant 0 : index
    %1 = vector.load %arg1[%c0_1, %c0_2] : memref<8x32xf32, #tpu.memory_space<vmem>>, vector<8x32xf32>
    %c0_3 = arith.constant 0 : index
    %c0_4 = arith.constant 0 : index
    %2 = vector.load %arg2[%c0_3, %c0_4] : memref<8x32xf32, #tpu.memory_space<vmem>>, vector<8x32xf32>
    %c0_i32 = arith.constant 0 : i32
    %3 = arith.index_cast %c0_i32 : i32 to index
    %c0_5 = arith.constant 0 : index
    %c0_6 = arith.constant 0 : index
    %4 = vector.load %arg0[%3, %c0_5, %c0_6] : memref<8x8x128xf32, #tpu.memory_space<vmem>>, vector<1x8x128xf32>
    %5 = vector.shape_cast %4 : vector<1x8x128xf32> to vector<8x128xf32>
    %cst = arith.constant dense<0.000000e+00> : vector<8x128xf32>
    %6 = tpu.matmul %1, %0, %cst {dimension_numbers = #tpu.dot_dimension_numbers<[1], [0], [0], [1], [0, 0, 1, 1], [], []>} : vector<8x32xf32>, vector<32x128xf32>, vector<8x128xf32> -> vector<8x128xf32>
    %7 = arith.addf %5, %6 : vector<8x128xf32>
    %8 = vector.extract_strided_slice %7 {offsets = [0, 0], sizes = [8, 32], strides = [1, 1]} : vector<8x128xf32> to vector<8x32xf32>
    %9 = arith.negf %8 : vector<8x32xf32>
    %10 = math.exp %9 : vector<8x32xf32>
    %cst_7 = arith.constant 1.000000e+00 : f32
    %11 = vector.broadcast %cst_7 : f32 to vector<8x32xf32>
    %12 = arith.addf %11, %10 : vector<8x32xf32>
    %13 = arith.divf %11, %12 : vector<8x32xf32>
    %14 = vector.extract_strided_slice %7 {offsets = [0, 32], sizes = [8, 32], strides = [1, 1]} : vector<8x128xf32> to vector<8x32xf32>
    %15 = arith.negf %14 : vector<8x32xf32>
    %16 = math.exp %15 : vector<8x32xf32>
    %cst_8 = arith.constant 1.000000e+00 : f32
    %17 = vector.broadcast %cst_8 : f32 to vector<8x32xf32>
    %18 = arith.addf %17, %16 : vector<8x32xf32>
    %19 = arith.divf %17, %18 : vector<8x32xf32>
    %20 = vector.extract_strided_slice %7 {offsets = [0, 64], sizes = [8, 32], strides = [1, 1]} : vector<8x128xf32> to vector<8x32xf32>
    %21 = math.tanh %20 : vector<8x32xf32>
    %22 = vector.extract_strided_slice %7 {offsets = [0, 96], sizes = [8, 32], strides = [1, 1]} : vector<8x128xf32> to vector<8x32xf32>
    %23 = arith.negf %22 : vector<8x32xf32>
    %24 = math.exp %23 : vector<8x32xf32>
    %cst_9 = arith.constant 1.000000e+00 : f32
    %25 = vector.broadcast %cst_9 : f32 to vector<8x32xf32>
    %26 = arith.addf %25, %24 : vector<8x32xf32>
    %27 = arith.divf %25, %26 : vector<8x32xf32>
    %28 = arith.mulf %19, %2 : vector<8x32xf32>
    %29 = arith.mulf %13, %21 : vector<8x32xf32>
    %30 = arith.addf %28, %29 : vector<8x32xf32>
    %31 = math.tanh %30 : vector<8x32xf32>
    %32 = arith.mulf %27, %31 : vector<8x32xf32>
    %33 = arith.index_cast %c0_i32 : i32 to index
    %c0_10 = arith.constant 0 : index
    %c0_11 = arith.constant 0 : index
    %34 = vector.load %arg4[%33, %c0_10, %c0_11] : memref<8x8x32xf32, #tpu.memory_space<vmem>>, vector<1x8x32xf32>
    %35 = vector.shape_cast %34 : vector<1x8x32xf32> to vector<8x32xf32>
    %36 = vector.shape_cast %32 : vector<8x32xf32> to vector<1x8x32xf32>
    tpu.vector_store %arg4[%33, %c0_10, %c0_11], %36 {strides = array<i32>} : memref<8x8x32xf32, #tpu.memory_space<vmem>>, vector<1x8x32xf32>,
    %c1_i32 = arith.constant 1 : i32
    %37 = arith.index_cast %c1_i32 : i32 to index
    %c0_12 = arith.constant 0 : index
    %c0_13 = arith.constant 0 : index
    %38 = vector.load %arg0[%37, %c0_12, %c0_13] : memref<8x8x128xf32, #tpu.memory_space<vmem>>, vector<1x8x128xf32>
    %39 = vector.shape_cast %38 : vector<1x8x128xf32> to vector<8x128xf32>
    %cst_14 = arith.constant dense<0.000000e+00> : vector<8x128xf32>
    %40 = tpu.matmul %32, %0, %cst_14 {dimension_numbers = #tpu.dot_dimension_numbers<[1], [0], [0], [1], [0, 0, 1, 1], [], []>} : vector<8x32xf32>, vector<32x128xf32>, vector<8x128xf32> -> vector<8x128xf32>
    %41 = arith.addf %39, %40 : vector<8x128xf32>
    %42 = vector.extract_strided_slice %41 {offsets = [0, 0], sizes = [8, 32], strides = [1, 1]} : vector<8x128xf32> to vector<8x32xf32>
    %43 = arith.negf %42 : vector<8x32xf32>
    %44 = math.exp %43 : vector<8x32xf32>
    %cst_15 = arith.constant 1.000000e+00 : f32
    %45 = vector.broadcast %cst_15 : f32 to vector<8x32xf32>
    %46 = arith.addf %45, %44 : vector<8x32xf32>
    %47 = arith.divf %45, %46 : vector<8x32xf32>
    %48 = vector.extract_strided_slice %41 {offsets = [0, 32], sizes = [8, 32], strides = [1, 1]} : vector<8x128xf32> to vector<8x32xf32>
    %49 = arith.negf %48 : vector<8x32xf32>
    %50 = math.exp %49 : vector<8x32xf32>
    %cst_16 = arith.constant 1.000000e+00 : f32
    %51 = vector.broadcast %cst_16 : f32 to vector<8x32xf32>
    %52 = arith.addf %51, %50 : vector<8x32xf32>
    %53 = arith.divf %51, %52 : vector<8x32xf32>
    %54 = vector.extract_strided_slice %41 {offsets = [0, 64], sizes = [8, 32], strides = [1, 1]} : vector<8x128xf32> to vector<8x32xf32>
    %55 = math.tanh %54 : vector<8x32xf32>
    %56 = vector.extract_strided_slice %41 {offsets = [0, 96], sizes = [8, 32], strides = [1, 1]} : vector<8x128xf32> to vector<8x32xf32>
    %57 = arith.negf %56 : vector<8x32xf32>
    %58 = math.exp %57 : vector<8x32xf32>
    %cst_17 = arith.constant 1.000000e+00 : f32
    %59 = vector.broadcast %cst_17 : f32 to vector<8x32xf32>
    %60 = arith.addf %59, %58 : vector<8x32xf32>
    %61 = arith.divf %59, %60 : vector<8x32xf32>
    %62 = arith.mulf %53, %30 : vector<8x32xf32>
    %63 = arith.mulf %47, %55 : vector<8x32xf32>
    %64 = arith.addf %62, %63 : vector<8x32xf32>
    %65 = math.tanh %64 : vector<8x32xf32>
    %66 = arith.mulf %61, %65 : vector<8x32xf32>
    %67 = arith.index_cast %c1_i32 : i32 to index
    %c0_18 = arith.constant 0 : index
    %c0_19 = arith.constant 0 : index
    %68 = vector.load %arg4[%67, %c0_18, %c0_19] : memref<8x8x32xf32, #tpu.memory_space<vmem>>, vector<1x8x32xf32>
    %69 = vector.shape_cast %68 : vector<1x8x32xf32> to vector<8x32xf32>
    %70 = vector.shape_cast %66 : vector<8x32xf32> to vector<1x8x32xf32>
    tpu.vector_store %arg4[%67, %c0_18, %c0_19], %70 {strides = array<i32>} : memref<8x8x32xf32, #tpu.memory_space<vmem>>, vector<1x8x32xf32>,
    %c2_i32 = arith.constant 2 : i32
    %71 = arith.index_cast %c2_i32 : i32 to index
    %c0_20 = arith.constant 0 : index
    %c0_21 = arith.constant 0 : index
    %72 = vector.load %arg0[%71, %c0_20, %c0_21] : memref<8x8x128xf32, #tpu.memory_space<vmem>>, vector<1x8x128xf32>
    %73 = vector.shape_cast %72 : vector<1x8x128xf32> to vector<8x128xf32>
    %cst_22 = arith.constant dense<0.000000e+00> : vector<8x128xf32>
    %74 = tpu.matmul %66, %0, %cst_22 {dimension_numbers = #tpu.dot_dimension_numbers<[1], [0], [0], [1], [0, 0, 1, 1], [], []>} : vector<8x32xf32>, vector<32x128xf32>, vector<8x128xf32> -> vector<8x128xf32>
    %75 = arith.addf %73, %74 : vector<8x128xf32>
    %76 = vector.extract_strided_slice %75 {offsets = [0, 0], sizes = [8, 32], strides = [1, 1]} : vector<8x128xf32> to vector<8x32xf32>
    %77 = arith.negf %76 : vector<8x32xf32>
    %78 = math.exp %77 : vector<8x32xf32>
    %cst_23 = arith.constant 1.000000e+00 : f32
    %79 = vector.broadcast %cst_23 : f32 to vector<8x32xf32>
    %80 = arith.addf %79, %78 : vector<8x32xf32>
    %81 = arith.divf %79, %80 : vector<8x32xf32>
    %82 = vector.extract_strided_slice %75 {offsets = [0, 32], sizes = [8, 32], strides = [1, 1]} : vector<8x128xf32> to vector<8x32xf32>
    %83 = arith.negf %82 : vector<8x32xf32>
    %84 = math.exp %83 : vector<8x32xf32>
    %cst_24 = arith.constant 1.000000e+00 : f32
    %85 = vector.broadcast %cst_24 : f32 to vector<8x32xf32>
    %86 = arith.addf %85, %84 : vector<8x32xf32>
    %87 = arith.divf %85, %86 : vector<8x32xf32>
    %88 = vector.extract_strided_slice %75 {offsets = [0, 64], sizes = [8, 32], strides = [1, 1]} : vector<8x128xf32> to vector<8x32xf32>
    %89 = math.tanh %88 : vector<8x32xf32>
    %90 = vector.extract_strided_slice %75 {offsets = [0, 96], sizes = [8, 32], strides = [1, 1]} : vector<8x128xf32> to vector<8x32xf32>
    %91 = arith.negf %90 : vector<8x32xf32>
    %92 = math.exp %91 : vector<8x32xf32>
    %cst_25 = arith.constant 1.000000e+00 : f32
    %93 = vector.broadcast %cst_25 : f32 to vector<8x32xf32>
    %94 = arith.addf %93, %92 : vector<8x32xf32>
    %95 = arith.divf %93, %94 : vector<8x32xf32>
    %96 = arith.mulf %87, %64 : vector<8x32xf32>
    %97 = arith.mulf %81, %89 : vector<8x32xf32>
    %98 = arith.addf %96, %97 : vector<8x32xf32>
    %99 = math.tanh %98 : vector<8x32xf32>
    %100 = arith.mulf %95, %99 : vector<8x32xf32>
    %101 = arith.index_cast %c2_i32 : i32 to index
    %c0_26 = arith.constant 0 : index
    %c0_27 = arith.constant 0 : index
    %102 = vector.load %arg4[%101, %c0_26, %c0_27] : memref<8x8x32xf32, #tpu.memory_space<vmem>>, vector<1x8x32xf32>
    %103 = vector.shape_cast %102 : vector<1x8x32xf32> to vector<8x32xf32>
    %104 = vector.shape_cast %100 : vector<8x32xf32> to vector<1x8x32xf32>
    tpu.vector_store %arg4[%101, %c0_26, %c0_27], %104 {strides = array<i32>} : memref<8x8x32xf32, #tpu.memory_space<vmem>>, vector<1x8x32xf32>,
    %c3_i32 = arith.constant 3 : i32
    %105 = arith.index_cast %c3_i32 : i32 to index
    %c0_28 = arith.constant 0 : index
    %c0_29 = arith.constant 0 : index
    %106 = vector.load %arg0[%105, %c0_28, %c0_29] : memref<8x8x128xf32, #tpu.memory_space<vmem>>, vector<1x8x128xf32>
    %107 = vector.shape_cast %106 : vector<1x8x128xf32> to vector<8x128xf32>
    %cst_30 = arith.constant dense<0.000000e+00> : vector<8x128xf32>
    %108 = tpu.matmul %100, %0, %cst_30 {dimension_numbers = #tpu.dot_dimension_numbers<[1], [0], [0], [1], [0, 0, 1, 1], [], []>} : vector<8x32xf32>, vector<32x128xf32>, vector<8x128xf32> -> vector<8x128xf32>
    %109 = arith.addf %107, %108 : vector<8x128xf32>
    %110 = vector.extract_strided_slice %109 {offsets = [0, 0], sizes = [8, 32], strides = [1, 1]} : vector<8x128xf32> to vector<8x32xf32>
    %111 = arith.negf %110 : vector<8x32xf32>
    %112 = math.exp %111 : vector<8x32xf32>
    %cst_31 = arith.constant 1.000000e+00 : f32
    %113 = vector.broadcast %cst_31 : f32 to vector<8x32xf32>
    %114 = arith.addf %113, %112 : vector<8x32xf32>
    %115 = arith.divf %113, %114 : vector<8x32xf32>
    %116 = vector.extract_strided_slice %109 {offsets = [0, 32], sizes = [8, 32], strides = [1, 1]} : vector<8x128xf32> to vector<8x32xf32>
    %117 = arith.negf %116 : vector<8x32xf32>
    %118 = math.exp %117 : vector<8x32xf32>
    %cst_32 = arith.constant 1.000000e+00 : f32
    %119 = vector.broadcast %cst_32 : f32 to vector<8x32xf32>
    %120 = arith.addf %119, %118 : vector<8x32xf32>
    %121 = arith.divf %119, %120 : vector<8x32xf32>
    %122 = vector.extract_strided_slice %109 {offsets = [0, 64], sizes = [8, 32], strides = [1, 1]} : vector<8x128xf32> to vector<8x32xf32>
    %123 = math.tanh %122 : vector<8x32xf32>
    %124 = vector.extract_strided_slice %109 {offsets = [0, 96], sizes = [8, 32], strides = [1, 1]} : vector<8x128xf32> to vector<8x32xf32>
    %125 = arith.negf %124 : vector<8x32xf32>
    %126 = math.exp %125 : vector<8x32xf32>
    %cst_33 = arith.constant 1.000000e+00 : f32
    %127 = vector.broadcast %cst_33 : f32 to vector<8x32xf32>
    %128 = arith.addf %127, %126 : vector<8x32xf32>
    %129 = arith.divf %127, %128 : vector<8x32xf32>
    %130 = arith.mulf %121, %98 : vector<8x32xf32>
    %131 = arith.mulf %115, %123 : vector<8x32xf32>
    %132 = arith.addf %130, %131 : vector<8x32xf32>
    %133 = math.tanh %132 : vector<8x32xf32>
    %134 = arith.mulf %129, %133 : vector<8x32xf32>
    %135 = arith.index_cast %c3_i32 : i32 to index
    %c0_34 = arith.constant 0 : index
    %c0_35 = arith.constant 0 : index
    %136 = vector.load %arg4[%135, %c0_34, %c0_35] : memref<8x8x32xf32, #tpu.memory_space<vmem>>, vector<1x8x32xf32>
    %137 = vector.shape_cast %136 : vector<1x8x32xf32> to vector<8x32xf32>
    %138 = vector.shape_cast %134 : vector<8x32xf32> to vector<1x8x32xf32>
    tpu.vector_store %arg4[%135, %c0_34, %c0_35], %138 {strides = array<i32>} : memref<8x8x32xf32, #tpu.memory_space<vmem>>, vector<1x8x32xf32>,
    %c4_i32 = arith.constant 4 : i32
    %139 = arith.index_cast %c4_i32 : i32 to index
    %c0_36 = arith.constant 0 : index
    %c0_37 = arith.constant 0 : index
    %140 = vector.load %arg0[%139, %c0_36, %c0_37] : memref<8x8x128xf32, #tpu.memory_space<vmem>>, vector<1x8x128xf32>
    %141 = vector.shape_cast %140 : vector<1x8x128xf32> to vector<8x128xf32>
    %cst_38 = arith.constant dense<0.000000e+00> : vector<8x128xf32>
    %142 = tpu.matmul %134, %0, %cst_38 {dimension_numbers = #tpu.dot_dimension_numbers<[1], [0], [0], [1], [0, 0, 1, 1], [], []>} : vector<8x32xf32>, vector<32x128xf32>, vector<8x128xf32> -> vector<8x128xf32>
    %143 = arith.addf %141, %142 : vector<8x128xf32>
    %144 = vector.extract_strided_slice %143 {offsets = [0, 0], sizes = [8, 32], strides = [1, 1]} : vector<8x128xf32> to vector<8x32xf32>
    %145 = arith.negf %144 : vector<8x32xf32>
    %146 = math.exp %145 : vector<8x32xf32>
    %cst_39 = arith.constant 1.000000e+00 : f32
    %147 = vector.broadcast %cst_39 : f32 to vector<8x32xf32>
    %148 = arith.addf %147, %146 : vector<8x32xf32>
    %149 = arith.divf %147, %148 : vector<8x32xf32>
    %150 = vector.extract_strided_slice %143 {offsets = [0, 32], sizes = [8, 32], strides = [1, 1]} : vector<8x128xf32> to vector<8x32xf32>
    %151 = arith.negf %150 : vector<8x32xf32>
    %152 = math.exp %151 : vector<8x32xf32>
    %cst_40 = arith.constant 1.000000e+00 : f32
    %153 = vector.broadcast %cst_40 : f32 to vector<8x32xf32>
    %154 = arith.addf %153, %152 : vector<8x32xf32>
    %155 = arith.divf %153, %154 : vector<8x32xf32>
    %156 = vector.extract_strided_slice %143 {offsets = [0, 64], sizes = [8, 32], strides = [1, 1]} : vector<8x128xf32> to vector<8x32xf32>
    %157 = math.tanh %156 : vector<8x32xf32>
    %158 = vector.extract_strided_slice %143 {offsets = [0, 96], sizes = [8, 32], strides = [1, 1]} : vector<8x128xf32> to vector<8x32xf32>
    %159 = arith.negf %158 : vector<8x32xf32>
    %160 = math.exp %159 : vector<8x32xf32>
    %cst_41 = arith.constant 1.000000e+00 : f32
    %161 = vector.broadcast %cst_41 : f32 to vector<8x32xf32>
    %162 = arith.addf %161, %160 : vector<8x32xf32>
    %163 = arith.divf %161, %162 : vector<8x32xf32>
    %164 = arith.mulf %155, %132 : vector<8x32xf32>
    %165 = arith.mulf %149, %157 : vector<8x32xf32>
    %166 = arith.addf %164, %165 : vector<8x32xf32>
    %167 = math.tanh %166 : vector<8x32xf32>
    %168 = arith.mulf %163, %167 : vector<8x32xf32>
    %169 = arith.index_cast %c4_i32 : i32 to index
    %c0_42 = arith.constant 0 : index
    %c0_43 = arith.constant 0 : index
    %170 = vector.load %arg4[%169, %c0_42, %c0_43] : memref<8x8x32xf32, #tpu.memory_space<vmem>>, vector<1x8x32xf32>
    %171 = vector.shape_cast %170 : vector<1x8x32xf32> to vector<8x32xf32>
    %172 = vector.shape_cast %168 : vector<8x32xf32> to vector<1x8x32xf32>
    tpu.vector_store %arg4[%169, %c0_42, %c0_43], %172 {strides = array<i32>} : memref<8x8x32xf32, #tpu.memory_space<vmem>>, vector<1x8x32xf32>,
    %c5_i32 = arith.constant 5 : i32
    %173 = arith.index_cast %c5_i32 : i32 to index
    %c0_44 = arith.constant 0 : index
    %c0_45 = arith.constant 0 : index
    %174 = vector.load %arg0[%173, %c0_44, %c0_45] : memref<8x8x128xf32, #tpu.memory_space<vmem>>, vector<1x8x128xf32>
    %175 = vector.shape_cast %174 : vector<1x8x128xf32> to vector<8x128xf32>
    %cst_46 = arith.constant dense<0.000000e+00> : vector<8x128xf32>
    %176 = tpu.matmul %168, %0, %cst_46 {dimension_numbers = #tpu.dot_dimension_numbers<[1], [0], [0], [1], [0, 0, 1, 1], [], []>} : vector<8x32xf32>, vector<32x128xf32>, vector<8x128xf32> -> vector<8x128xf32>
    %177 = arith.addf %175, %176 : vector<8x128xf32>
    %178 = vector.extract_strided_slice %177 {offsets = [0, 0], sizes = [8, 32], strides = [1, 1]} : vector<8x128xf32> to vector<8x32xf32>
    %179 = arith.negf %178 : vector<8x32xf32>
    %180 = math.exp %179 : vector<8x32xf32>
    %cst_47 = arith.constant 1.000000e+00 : f32
    %181 = vector.broadcast %cst_47 : f32 to vector<8x32xf32>
    %182 = arith.addf %181, %180 : vector<8x32xf32>
    %183 = arith.divf %181, %182 : vector<8x32xf32>
    %184 = vector.extract_strided_slice %177 {offsets = [0, 32], sizes = [8, 32], strides = [1, 1]} : vector<8x128xf32> to vector<8x32xf32>
    %185 = arith.negf %184 : vector<8x32xf32>
    %186 = math.exp %185 : vector<8x32xf32>
    %cst_48 = arith.constant 1.000000e+00 : f32
    %187 = vector.broadcast %cst_48 : f32 to vector<8x32xf32>
    %188 = arith.addf %187, %186 : vector<8x32xf32>
    %189 = arith.divf %187, %188 : vector<8x32xf32>
    %190 = vector.extract_strided_slice %177 {offsets = [0, 64], sizes = [8, 32], strides = [1, 1]} : vector<8x128xf32> to vector<8x32xf32>
    %191 = math.tanh %190 : vector<8x32xf32>
    %192 = vector.extract_strided_slice %177 {offsets = [0, 96], sizes = [8, 32], strides = [1, 1]} : vector<8x128xf32> to vector<8x32xf32>
    %193 = arith.negf %192 : vector<8x32xf32>
    %194 = math.exp %193 : vector<8x32xf32>
    %cst_49 = arith.constant 1.000000e+00 : f32
    %195 = vector.broadcast %cst_49 : f32 to vector<8x32xf32>
    %196 = arith.addf %195, %194 : vector<8x32xf32>
    %197 = arith.divf %195, %196 : vector<8x32xf32>
    %198 = arith.mulf %189, %166 : vector<8x32xf32>
    %199 = arith.mulf %183, %191 : vector<8x32xf32>
    %200 = arith.addf %198, %199 : vector<8x32xf32>
    %201 = math.tanh %200 : vector<8x32xf32>
    %202 = arith.mulf %197, %201 : vector<8x32xf32>
    %203 = arith.index_cast %c5_i32 : i32 to index
    %c0_50 = arith.constant 0 : index
    %c0_51 = arith.constant 0 : index
    %204 = vector.load %arg4[%203, %c0_50, %c0_51] : memref<8x8x32xf32, #tpu.memory_space<vmem>>, vector<1x8x32xf32>
    %205 = vector.shape_cast %204 : vector<1x8x32xf32> to vector<8x32xf32>
    %206 = vector.shape_cast %202 : vector<8x32xf32> to vector<1x8x32xf32>
    tpu.vector_store %arg4[%203, %c0_50, %c0_51], %206 {strides = array<i32>} : memref<8x8x32xf32, #tpu.memory_space<vmem>>, vector<1x8x32xf32>,
    %c6_i32 = arith.constant 6 : i32
    %207 = arith.index_cast %c6_i32 : i32 to index
    %c0_52 = arith.constant 0 : index
    %c0_53 = arith.constant 0 : index
    %208 = vector.load %arg0[%207, %c0_52, %c0_53] : memref<8x8x128xf32, #tpu.memory_space<vmem>>, vector<1x8x128xf32>
    %209 = vector.shape_cast %208 : vector<1x8x128xf32> to vector<8x128xf32>
    %cst_54 = arith.constant dense<0.000000e+00> : vector<8x128xf32>
    %210 = tpu.matmul %202, %0, %cst_54 {dimension_numbers = #tpu.dot_dimension_numbers<[1], [0], [0], [1], [0, 0, 1, 1], [], []>} : vector<8x32xf32>, vector<32x128xf32>, vector<8x128xf32> -> vector<8x128xf32>
    %211 = arith.addf %209, %210 : vector<8x128xf32>
    %212 = vector.extract_strided_slice %211 {offsets = [0, 0], sizes = [8, 32], strides = [1, 1]} : vector<8x128xf32> to vector<8x32xf32>
    %213 = arith.negf %212 : vector<8x32xf32>
    %214 = math.exp %213 : vector<8x32xf32>
    %cst_55 = arith.constant 1.000000e+00 : f32
    %215 = vector.broadcast %cst_55 : f32 to vector<8x32xf32>
    %216 = arith.addf %215, %214 : vector<8x32xf32>
    %217 = arith.divf %215, %216 : vector<8x32xf32>
    %218 = vector.extract_strided_slice %211 {offsets = [0, 32], sizes = [8, 32], strides = [1, 1]} : vector<8x128xf32> to vector<8x32xf32>
    %219 = arith.negf %218 : vector<8x32xf32>
    %220 = math.exp %219 : vector<8x32xf32>
    %cst_56 = arith.constant 1.000000e+00 : f32
    %221 = vector.broadcast %cst_56 : f32 to vector<8x32xf32>
    %222 = arith.addf %221, %220 : vector<8x32xf32>
    %223 = arith.divf %221, %222 : vector<8x32xf32>
    %224 = vector.extract_strided_slice %211 {offsets = [0, 64], sizes = [8, 32], strides = [1, 1]} : vector<8x128xf32> to vector<8x32xf32>
    %225 = math.tanh %224 : vector<8x32xf32>
    %226 = vector.extract_strided_slice %211 {offsets = [0, 96], sizes = [8, 32], strides = [1, 1]} : vector<8x128xf32> to vector<8x32xf32>
    %227 = arith.negf %226 : vector<8x32xf32>
    %228 = math.exp %227 : vector<8x32xf32>
    %cst_57 = arith.constant 1.000000e+00 : f32
    %229 = vector.broadcast %cst_57 : f32 to vector<8x32xf32>
    %230 = arith.addf %229, %228 : vector<8x32xf32>
    %231 = arith.divf %229, %230 : vector<8x32xf32>
    %232 = arith.mulf %223, %200 : vector<8x32xf32>
    %233 = arith.mulf %217, %225 : vector<8x32xf32>
    %234 = arith.addf %232, %233 : vector<8x32xf32>
    %235 = math.tanh %234 : vector<8x32xf32>
    %236 = arith.mulf %231, %235 : vector<8x32xf32>
    %237 = arith.index_cast %c6_i32 : i32 to index
    %c0_58 = arith.constant 0 : index
    %c0_59 = arith.constant 0 : index
    %238 = vector.load %arg4[%237, %c0_58, %c0_59] : memref<8x8x32xf32, #tpu.memory_space<vmem>>, vector<1x8x32xf32>
    %239 = vector.shape_cast %238 : vector<1x8x32xf32> to vector<8x32xf32>
    %240 = vector.shape_cast %236 : vector<8x32xf32> to vector<1x8x32xf32>
    tpu.vector_store %arg4[%237, %c0_58, %c0_59], %240 {strides = array<i32>} : memref<8x8x32xf32, #tpu.memory_space<vmem>>, vector<1x8x32xf32>,
    %c7_i32 = arith.constant 7 : i32
    %241 = arith.index_cast %c7_i32 : i32 to index
    %c0_60 = arith.constant 0 : index
    %c0_61 = arith.constant 0 : index
    %242 = vector.load %arg0[%241, %c0_60, %c0_61] : memref<8x8x128xf32, #tpu.memory_space<vmem>>, vector<1x8x128xf32>
    %243 = vector.shape_cast %242 : vector<1x8x128xf32> to vector<8x128xf32>
    %cst_62 = arith.constant dense<0.000000e+00> : vector<8x128xf32>
    %244 = tpu.matmul %236, %0, %cst_62 {dimension_numbers = #tpu.dot_dimension_numbers<[1], [0], [0], [1], [0, 0, 1, 1], [], []>} : vector<8x32xf32>, vector<32x128xf32>, vector<8x128xf32> -> vector<8x128xf32>
    %245 = arith.addf %243, %244 : vector<8x128xf32>
    %246 = vector.extract_strided_slice %245 {offsets = [0, 0], sizes = [8, 32], strides = [1, 1]} : vector<8x128xf32> to vector<8x32xf32>
    %247 = arith.negf %246 : vector<8x32xf32>
    %248 = math.exp %247 : vector<8x32xf32>
    %cst_63 = arith.constant 1.000000e+00 : f32
    %249 = vector.broadcast %cst_63 : f32 to vector<8x32xf32>
    %250 = arith.addf %249, %248 : vector<8x32xf32>
    %251 = arith.divf %249, %250 : vector<8x32xf32>
    %252 = vector.extract_strided_slice %245 {offsets = [0, 32], sizes = [8, 32], strides = [1, 1]} : vector<8x128xf32> to vector<8x32xf32>
    %253 = arith.negf %252 : vector<8x32xf32>
    %254 = math.exp %253 : vector<8x32xf32>
    %cst_64 = arith.constant 1.000000e+00 : f32
    %255 = vector.broadcast %cst_64 : f32 to vector<8x32xf32>
    %256 = arith.addf %255, %254 : vector<8x32xf32>
    %257 = arith.divf %255, %256 : vector<8x32xf32>
    %258 = vector.extract_strided_slice %245 {offsets = [0, 64], sizes = [8, 32], strides = [1, 1]} : vector<8x128xf32> to vector<8x32xf32>
    %259 = math.tanh %258 : vector<8x32xf32>
    %260 = vector.extract_strided_slice %245 {offsets = [0, 96], sizes = [8, 32], strides = [1, 1]} : vector<8x128xf32> to vector<8x32xf32>
    %261 = arith.negf %260 : vector<8x32xf32>
    %262 = math.exp %261 : vector<8x32xf32>
    %cst_65 = arith.constant 1.000000e+00 : f32
    %263 = vector.broadcast %cst_65 : f32 to vector<8x32xf32>
    %264 = arith.addf %263, %262 : vector<8x32xf32>
    %265 = arith.divf %263, %264 : vector<8x32xf32>
    %266 = arith.mulf %257, %234 : vector<8x32xf32>
    %267 = arith.mulf %251, %259 : vector<8x32xf32>
    %268 = arith.addf %266, %267 : vector<8x32xf32>
    %269 = math.tanh %268 : vector<8x32xf32>
    %270 = arith.mulf %265, %269 : vector<8x32xf32>
    %271 = arith.index_cast %c7_i32 : i32 to index
    %c0_66 = arith.constant 0 : index
    %c0_67 = arith.constant 0 : index
    %272 = vector.load %arg4[%271, %c0_66, %c0_67] : memref<8x8x32xf32, #tpu.memory_space<vmem>>, vector<1x8x32xf32>
    %273 = vector.shape_cast %272 : vector<1x8x32xf32> to vector<8x32xf32>
    %274 = vector.shape_cast %270 : vector<8x32xf32> to vector<1x8x32xf32>
    tpu.vector_store %arg4[%271, %c0_66, %c0_67], %274 {strides = array<i32>} : memref<8x8x32xf32, #tpu.memory_space<vmem>>, vector<1x8x32xf32>,
    %c8_i32 = arith.constant 8 : i32
    %c0_68 = arith.constant 0 : index
    %c0_69 = arith.constant 0 : index
    %275 = vector.load %arg5[%c0_68, %c0_69] : memref<8x32xf32, #tpu.memory_space<vmem>>, vector<8x32xf32>
    tpu.vector_store %arg5[%c0_68, %c0_69], %270 {strides = array<i32>} : memref<8x32xf32, #tpu.memory_space<vmem>>, vector<8x32xf32>,
    %c0_70 = arith.constant 0 : index
    %c0_71 = arith.constant 0 : index
    %276 = vector.load %arg6[%c0_70, %c0_71] : memref<8x32xf32, #tpu.memory_space<vmem>>, vector<8x32xf32>
    tpu.vector_store %arg6[%c0_70, %c0_71], %268 {strides = array<i32>} : memref<8x32xf32, #tpu.memory_space<vmem>>, vector<8x32xf32>,
    return
  }
}

module attributes {stable_mosaic.version = 11 : i64} {
  func.func @_matmul_bias_kernel(%arg0: i32, %arg1: i32, %arg2: memref<64x32xf32, #tpu.memory_space<vmem>>, %arg3: memref<32x128xf32, #tpu.memory_space<vmem>>, %arg4: memref<1x128xf32, #tpu.memory_space<vmem>>, %arg5: memref<64x128xf32, #tpu.memory_space<vmem>>) attributes {dimension_semantics = [#tpu.dimension_semantics<parallel>, #tpu.dimension_semantics<parallel>], iteration_bounds = array<i64: 1, 1>, scalar_prefetch = 0 : i64, scratch_operands = 0 : i64, tpu.core_type = #tpu.core_type<tc>, window_params = [{transform_indices = @transform_0, window_bounds = array<i64: 64, 32>}, {transform_indices = @transform_1, window_bounds = array<i64: 32, 128>}, {transform_indices = @transform_2, window_bounds = array<i64: 1, 128>}, {transform_indices = @transform_3, window_bounds = array<i64: 64, 128>}]} {
    %c0 = arith.constant 0 : index
    %c0_0 = arith.constant 0 : index
    %0 = vector.load %arg2[%c0, %c0_0] : memref<64x32xf32, #tpu.memory_space<vmem>>, vector<64x32xf32>
    %c0_1 = arith.constant 0 : index
    %c0_2 = arith.constant 0 : index
    %1 = vector.load %arg3[%c0_1, %c0_2] : memref<32x128xf32, #tpu.memory_space<vmem>>, vector<32x128xf32>
    %cst = arith.constant dense<0.000000e+00> : vector<64x128xf32>
    %2 = tpu.matmul %0, %1, %cst {dimension_numbers = #tpu.dot_dimension_numbers<[1], [0], [0], [1], [0, 0, 1, 1], [], []>} : vector<64x32xf32>, vector<32x128xf32>, vector<64x128xf32> -> vector<64x128xf32>
    %c0_3 = arith.constant 0 : index
    %c0_4 = arith.constant 0 : index
    %3 = vector.load %arg4[%c0_3, %c0_4] : memref<1x128xf32, #tpu.memory_space<vmem>>, vector<1x128xf32>
    %4 = vector.broadcast %3 : vector<1x128xf32> to vector<64x128xf32>
    %5 = arith.addf %2, %4 : vector<64x128xf32>
    %c0_5 = arith.constant 0 : index
    %c0_6 = arith.constant 0 : index
    %6 = vector.load %arg5[%c0_5, %c0_6] : memref<64x128xf32, #tpu.memory_space<vmem>>, vector<64x128xf32>
    tpu.vector_store %arg5[%c0_5, %c0_6], %5 {strides = array<i32>} : memref<64x128xf32, #tpu.memory_space<vmem>>, vector<64x128xf32>,
    return
  }
  func.func @transform_0(%arg0: i32, %arg1: i32) -> (i32, i32) {
    %c0_i32 = arith.constant 0 : i32
    %c0_i32_0 = arith.constant 0 : i32
    return %arg0, %c0_i32 : i32, i32
  }
  func.func @transform_1(%arg0: i32, %arg1: i32) -> (i32, i32) {
    %c0_i32 = arith.constant 0 : i32
    %c0_i32_0 = arith.constant 0 : i32
    return %c0_i32, %arg1 : i32, i32
  }
  func.func @transform_2(%arg0: i32, %arg1: i32) -> (i32, i32) {
    %c0_i32 = arith.constant 0 : i32
    %c0_i32_0 = arith.constant 0 : i32
    return %c0_i32, %arg1 : i32, i32
  }
  func.func @transform_3(%arg0: i32, %arg1: i32) -> (i32, i32) {
    %c0_i32 = arith.constant 0 : i32
    return %arg0, %arg1 : i32, i32
  }
}

</mosaic_0001>

<llo_original>
// kernel: rnn_model_forward.5
$region0: #{rnn_model_forward.5}
  #allocation0 [shape = 'u32[]', space=smem, size = 0x4, offset = 0x4, fixed_abs, tag = 'smem constant byte address 0x4 - core index']
  #allocation1 [shape = 'u32[144,128]{1,0:T(1,128)}', space=vmem, size = 0x12000, scoped, tag = 'internal scratch']
  %s0 = inlined_call_operand.vmem [shape: f32[64,32], index: 0, kind: input, shape index: {}]
  %s1 = inlined_call_operand.vmem [shape: f32[32,128], index: 1, kind: input, shape index: {}]
  %s2 = inlined_call_operand.vmem [shape: f32[1,128], index: 2, kind: input, shape index: {}]
  %s3 = inlined_call_operand.vmem [shape: f32[64,128], index: 3, kind: output, shape index: {}]
  %s4 = sld [smem:[#allocation0]]
  $region22: #{rnn_model_forward.5} parent=0
    _
  %s6 = ssub.s32 1, %s4
  %s7 = scalar_select 0, %s6, %s4
  // Predicated region
  $region2: #{rnn_model_forward.5} parent=0 // pred_check
    _
  $region3: #{rnn_model_forward.5} parent=0 // pred_check_branch
    %9 = sbr.rel (0) target = $region5
  $region4: #{rnn_model_forward.5} parent=0 // pred_region
    _
  $region5: #{rnn_model_forward.5} parent=0 // pred_fallthru
    _
  // Predicated region
  $region6: #{rnn_model_forward.5} parent=0 // pred_check
    _
  $region7: #{rnn_model_forward.5} parent=0 // pred_check_branch
    %11 = sbr.rel (0) target = $region9
  $region8: #{rnn_model_forward.5} parent=0 // pred_region
    _
  $region9: #{rnn_model_forward.5} parent=0 // pred_fallthru
    _
  // Predicated region
  $region10: #{rnn_model_forward.5} parent=0 // pred_check
    _
  $region11: #{rnn_model_forward.5} parent=0 // pred_check_branch
    %13 = sbr.rel (0) target = $region13
  $region12: #{rnn_model_forward.5} parent=0 // pred_region
    _
  $region13: #{rnn_model_forward.5} parent=0 // pred_fallthru
    _
  %v14 = vld [vmem:[%s0] sm:$0xff]
  %v15 = vld [vmem:[%s0 + $0x8] sm:$0xff]
  %v16 = vld [vmem:[%s0 + $0x10] sm:$0xff]
  %v17 = vld [vmem:[%s0 + $0x18] sm:$0xff]
  %v18 = vld [vmem:[%s0 + $0x20] sm:$0xff]
  %v19 = vld [vmem:[%s0 + $0x28] sm:$0xff]
  %v20 = vld [vmem:[%s0 + $0x30] sm:$0xff]
  %v21 = vld [vmem:[%s0 + $0x38] sm:$0xff]
  %v22 = vld [vmem:[%s1] sm:$0xff]
  %v23 = vld [vmem:[%s1 + $0x8] sm:$0xff]
  %v24 = vld [vmem:[%s1 + $0x10] sm:$0xff]
  %v25 = vld [vmem:[%s1 + $0x18] sm:$0xff]
  %v26 = vld [vmem:[%s2] sm:$0x1]
  %v28 = vlaneseq
  %v29 = vshrl.u32 %v28, 7
  %v30 = vsub.s32 0, %v29
  %v31 = vrot.slane %v26, %v30
  %vm33 = vcmask 261120
  %v35 = vsel %vm33, %v14, 0
  %v38 = vsel %vm33, %v15, 0
  %v41 = vsel %vm33, %v16, 0
  %v44 = vsel %vm33, %v17, 0
  %v47 = vsel %vm33, %v18, 0
  %v50 = vsel %vm33, %v19, 0
  %v53 = vsel %vm33, %v20, 0
  %v56 = vsel %vm33, %v21, 0
  %58 = vmatprep.subr.mxu0 0.0
  %59 = vmatpush1.msra.mxu0 %v22
  %60 = vmatprep.subr.mxu0 0.0
  %61 = vmatpush1.msra.mxu0 %v23
  %62 = vmatprep.subr.mxu0 0.0
  %63 = vmatpush1.msra.mxu0 %v24
  %64 = vmatprep.subr.mxu0 0.0
  %65 = vmatpush1.msra.mxu0 %v25
  %66 = vmatprep.subr.mxu0 0.0
  %67 = vmatpush1.msra.mxu0 0.0
  %68 = vmatprep.subr.mxu0 0.0
  %69 = vmatpush1.msra.mxu0 0.0
  %70 = vmatprep.subr.mxu0 0.0
  %71 = vmatpush1.msra.mxu0 0.0
  %72 = vmatprep.subr.mxu0 0.0
  %73 = vmatpush1.msra.mxu0 0.0
  %74 = vmatprep.subr.mxu0 0.0
  %75 = vmatpush1.msra.mxu0 0.0
  %76 = vmatprep.subr.mxu0 0.0
  %77 = vmatpush1.msra.mxu0 0.0
  %78 = vmatprep.subr.mxu0 0.0
  %79 = vmatpush1.msra.mxu0 0.0
  %80 = vmatprep.subr.mxu0 0.0
  %81 = vmatpush1.msra.mxu0 0.0
  %82 = vmatprep.subr.mxu0 0.0
  %83 = vmatpush1.msra.mxu0 0.0
  %84 = vmatprep.subr.mxu0 0.0
  %85 = vmatpush1.msra.mxu0 0.0
  %86 = vmatprep.subr.mxu0 0.0
  %87 = vmatpush1.msra.mxu0 0.0
  %88 = vmatprep.subr.mxu0 0.0
  %89 = vmatpush1.msra.mxu0 0.0
  %90 = vmatprep.subr.mxu0 0.0
  %91 = vmatpush1.msra.mxu0 0.0
  %92 = vmatprep.subr.mxu0 0.0
  %93 = vmatpush1.msra.mxu0 0.0
  %94 = vmatprep.subr.mxu0 0.0
  %95 = vmatpush1.msra.mxu0 0.0
  %96 = vmatprep.subr.mxu0 0.0
  %97 = vmatpush1.msra.mxu0 0.0
  %98 = vmatprep.subr.mxu0 0.0
  %99 = vmatpush1.msra.mxu0 0.0
  %100 = vmatprep.subr.mxu0 0.0
  %101 = vmatpush1.msra.mxu0 0.0
  %102 = vmatprep.subr.mxu0 0.0
  %103 = vmatpush1.msra.mxu0 0.0
  %104 = vmatprep.subr.mxu0 0.0
  %105 = vmatpush1.msra.mxu0 0.0
  %106 = vmatprep.subr.mxu0 0.0
  %107 = vmatpush1.msra.mxu0 0.0
  %108 = vmatprep.subr.mxu0 0.0
  %109 = vmatpush1.msra.mxu0 0.0
  %110 = vmatprep.subr.mxu0 0.0
  %111 = vmatpush1.msra.mxu0 0.0
  %112 = vmatprep.subr.mxu0 0.0
  %113 = vmatpush1.msra.mxu0 0.0
  %114 = vmatprep.subr.mxu0 0.0
  %115 = vmatpush1.msra.mxu0 0.0
  %116 = vmatprep.subr.mxu0 0.0
  %117 = vmatpush1.msra.mxu0 0.0
  %118 = vmatprep.subr.mxu0 0.0
  %119 = vmatpush1.msra.mxu0 0.0
  %120 = vmatprep.subr.mxu0 0.0
  %121 = vmatpush1.msra.mxu0 0.0
  %122 = vmatprep.mubr.f32.mxu0 0.0
  %123 = vmatmul.mubr.f32.gmra.mrb[0].mxu0 %v35
  %v124 = vpop.f32.mrb[0].mxu0
  %v125 = vadd.f32 %v31, %v124
  %v126 = vpop.f32.mrb[0].mxu0
  %127 = vmatprep.mubr.f32.mxu0 0.0
  %128 = vmatmul.mubr.f32.gmra.mrb[0].mxu0 %v38
  %v129 = vpop.f32.mrb[0].mxu0
  %v130 = vadd.f32 %v31, %v129
  %v131 = vpop.f32.mrb[0].mxu0
  %132 = vmatprep.mubr.f32.mxu0 0.0
  %133 = vmatmul.mubr.f32.gmra.mrb[0].mxu0 %v41
  %v134 = vpop.f32.mrb[0].mxu0
  %v135 = vadd.f32 %v31, %v134
  %v136 = vpop.f32.mrb[0].mxu0
  %137 = vmatprep.mubr.f32.mxu0 0.0
  %138 = vmatmul.mubr.f32.gmra.mrb[0].mxu0 %v44
  %v139 = vpop.f32.mrb[0].mxu0
  %v140 = vadd.f32 %v31, %v139
  %v141 = vpop.f32.mrb[0].mxu0
  %142 = vmatprep.mubr.f32.mxu0 0.0
  %143 = vmatmul.mubr.f32.gmra.mrb[0].mxu0 %v47
  %v144 = vpop.f32.mrb[0].mxu0
  %v145 = vadd.f32 %v31, %v144
  %v146 = vpop.f32.mrb[0].mxu0
  %147 = vmatprep.mubr.f32.mxu0 0.0
  %148 = vmatmul.mubr.f32.gmra.mrb[0].mxu0 %v50
  %v149 = vpop.f32.mrb[0].mxu0
  %v150 = vadd.f32 %v31, %v149
  %v151 = vpop.f32.mrb[0].mxu0
  %152 = vmatprep.mubr.f32.mxu0 0.0
  %153 = vmatmul.mubr.f32.gmra.mrb[0].mxu0 %v53
  %v154 = vpop.f32.mrb[0].mxu0
  %v155 = vadd.f32 %v31, %v154
  %v156 = vpop.f32.mrb[0].mxu0
  %157 = vmatprep.mubr.f32.mxu0 0.0
  %158 = vmatmul.mubr.f32.gmra.mrb[0].mxu0 %v56
  %v159 = vpop.f32.mrb[0].mxu0
  %v160 = vadd.f32 %v31, %v159
  %v161 = vpop.f32.mrb[0].mxu0
  %162 = vdwg.mxu0
  %163 = vst [vmem:[%s3] sm:$0xff] %v125
  %164 = vst [vmem:[%s3 + $0x8] sm:$0xff] %v130
  %165 = vst [vmem:[%s3 + $0x10] sm:$0xff] %v135
  %166 = vst [vmem:[%s3 + $0x18] sm:$0xff] %v140
  %167 = vst [vmem:[%s3 + $0x20] sm:$0xff] %v145
  %168 = vst [vmem:[%s3 + $0x28] sm:$0xff] %v150
  %169 = vst [vmem:[%s3 + $0x30] sm:$0xff] %v155
  %170 = vst [vmem:[%s3 + $0x38] sm:$0xff] %v160
  // Predicated region
  $region14: #{rnn_model_forward.5} parent=0 // pred_check
    _
  $region15: #{rnn_model_forward.5} parent=0 // pred_check_branch
    %172 = sbr.rel (0) target = $region17
  $region16: #{rnn_model_forward.5} parent=0 // pred_region
    _
  $region17: #{rnn_model_forward.5} parent=0 // pred_fallthru
    _
  // Predicated region
  $region18: #{rnn_model_forward.5} parent=0 // pred_check
    _
  $region19: #{rnn_model_forward.5} parent=0 // pred_check_branch
    %174 = sbr.rel (0) target = $region21
  $region20: #{rnn_model_forward.5} parent=0 // pred_region
    _
  $region21: #{rnn_model_forward.5} parent=0 // pred_fallthru
    _

// kernel: rnn_model_forward.6
$region0: #{rnn_model_forward.6}
  #allocation0 [shape = 'u32[]', space=smem, size = 0x4, offset = 0x4, fixed_abs, tag = 'smem constant byte address 0x4 - core index']
  #allocation1 [shape = 'u32[144,128]{1,0:T(1,128)}', space=vmem, size = 0x12000, scoped, tag = 'internal scratch']
  %s0 = inlined_call_operand.vmem [shape: f32[8,8,128], index: 0, kind: input, shape index: {}]
  %s1 = inlined_call_operand.vmem [shape: f32[8,32], index: 1, kind: input, shape index: {}]
  %s2 = inlined_call_operand.vmem [shape: f32[8,32], index: 2, kind: input, shape index: {}]
  %s3 = inlined_call_operand.vmem [shape: f32[32,128], index: 3, kind: input, shape index: {}]
  %s4 = inlined_call_operand.vmem [shape: f32[8,8,32], index: 4, kind: output, shape index: {0}]
  %s5 = inlined_call_operand.vmem [shape: f32[8,32], index: 5, kind: output, shape index: {1}]
  %s6 = inlined_call_operand.vmem [shape: f32[8,32], index: 6, kind: output, shape index: {2}]
  %7 = xla_tuple %s4, %s5, %s6
  %s8 = sld [smem:[#allocation0]]
  $region42: #{rnn_model_forward.6} parent=0
    _
  %s10 = ssub.s32 1, %s8
  %s11 = scalar_select 0, %s10, %s8
  // Predicated region
  $region2: #{rnn_model_forward.6} parent=0 // pred_check
    _
  $region3: #{rnn_model_forward.6} parent=0 // pred_check_branch
    %13 = sbr.rel (0) target = $region5
  $region4: #{rnn_model_forward.6} parent=0 // pred_region
    _
  $region5: #{rnn_model_forward.6} parent=0 // pred_fallthru
    _
  // Predicated region
  $region6: #{rnn_model_forward.6} parent=0 // pred_check
    _
  $region7: #{rnn_model_forward.6} parent=0 // pred_check_branch
    %15 = sbr.rel (0) target = $region9
  $region8: #{rnn_model_forward.6} parent=0 // pred_region
    _
  $region9: #{rnn_model_forward.6} parent=0 // pred_fallthru
    _
  // Predicated region
  $region10: #{rnn_model_forward.6} parent=0 // pred_check
    _
  $region11: #{rnn_model_forward.6} parent=0 // pred_check_branch
    %17 = sbr.rel (0) target = $region13
  $region12: #{rnn_model_forward.6} parent=0 // pred_region
    _
  $region13: #{rnn_model_forward.6} parent=0 // pred_fallthru
    _
  // Predicated region
  $region14: #{rnn_model_forward.6} parent=0 // pred_check
    _
  $region15: #{rnn_model_forward.6} parent=0 // pred_check_branch
    %19 = sbr.rel (0) target = $region17
  $region16: #{rnn_model_forward.6} parent=0 // pred_region
    _
  $region17: #{rnn_model_forward.6} parent=0 // pred_fallthru
    _
  %v20 = vld [vmem:[%s3] sm:$0xff]
  %v21 = vld [vmem:[%s3 + $0x8] sm:$0xff]
  %v22 = vld [vmem:[%s3 + $0x10] sm:$0xff]
  %v23 = vld [vmem:[%s3 + $0x18] sm:$0xff]
  %v24 = vld [vmem:[%s1] sm:$0xff]
  %v25 = vld [vmem:[%s2] sm:$0xff]
  %v26 = vld [vmem:[%s0] sm:$0xff]
  %vm27 = vcmask 261120
  %v29 = vsel %vm27, %v24, 0
  %31 = vmatprep.subr.mxu0 0.0
  %32 = vmatpush1.msra.mxu0 %v20
  %33 = vmatprep.subr.mxu0 0.0
  %34 = vmatpush1.msra.mxu0 %v21
  %35 = vmatprep.subr.mxu0 0.0
  %36 = vmatpush1.msra.mxu0 %v22
  %37 = vmatprep.subr.mxu0 0.0
  %38 = vmatpush1.msra.mxu0 %v23
  %39 = vmatprep.subr.mxu0 0.0
  %40 = vmatpush1.msra.mxu0 0.0
  %41 = vmatprep.subr.mxu0 0.0
  %42 = vmatpush1.msra.mxu0 0.0
  %43 = vmatprep.subr.mxu0 0.0
  %44 = vmatpush1.msra.mxu0 0.0
  %45 = vmatprep.subr.mxu0 0.0
  %46 = vmatpush1.msra.mxu0 0.0
  %47 = vmatprep.subr.mxu0 0.0
  %48 = vmatpush1.msra.mxu0 0.0
  %49 = vmatprep.subr.mxu0 0.0
  %50 = vmatpush1.msra.mxu0 0.0
  %51 = vmatprep.subr.mxu0 0.0
  %52 = vmatpush1.msra.mxu0 0.0
  %53 = vmatprep.subr.mxu0 0.0
  %54 = vmatpush1.msra.mxu0 0.0
  %55 = vmatprep.subr.mxu0 0.0
  %56 = vmatpush1.msra.mxu0 0.0
  %57 = vmatprep.subr.mxu0 0.0
  %58 = vmatpush1.msra.mxu0 0.0
  %59 = vmatprep.subr.mxu0 0.0
  %60 = vmatpush1.msra.mxu0 0.0
  %61 = vmatprep.subr.mxu0 0.0
  %62 = vmatpush1.msra.mxu0 0.0
  %63 = vmatprep.subr.mxu0 0.0
  %64 = vmatpush1.msra.mxu0 0.0
  %65 = vmatprep.subr.mxu0 0.0
  %66 = vmatpush1.msra.mxu0 0.0
  %67 = vmatprep.subr.mxu0 0.0
  %68 = vmatpush1.msra.mxu0 0.0
  %69 = vmatprep.subr.mxu0 0.0
  %70 = vmatpush1.msra.mxu0 0.0
  %71 = vmatprep.subr.mxu0 0.0
  %72 = vmatpush1.msra.mxu0 0.0
  %73 = vmatprep.subr.mxu0 0.0
  %74 = vmatpush1.msra.mxu0 0.0
  %75 = vmatprep.subr.mxu0 0.0
  %76 = vmatpush1.msra.mxu0 0.0
  %77 = vmatprep.subr.mxu0 0.0
  %78 = vmatpush1.msra.mxu0 0.0
  %79 = vmatprep.subr.mxu0 0.0
  %80 = vmatpush1.msra.mxu0 0.0
  %81 = vmatprep.subr.mxu0 0.0
  %82 = vmatpush1.msra.mxu0 0.0
  %83 = vmatprep.subr.mxu0 0.0
  %84 = vmatpush1.msra.mxu0 0.0
  %85 = vmatprep.subr.mxu0 0.0
  %86 = vmatpush1.msra.mxu0 0.0
  %87 = vmatprep.subr.mxu0 0.0
  %88 = vmatpush1.msra.mxu0 0.0
  %89 = vmatprep.subr.mxu0 0.0
  %90 = vmatpush1.msra.mxu0 0.0
  %91 = vmatprep.subr.mxu0 0.0
  %92 = vmatpush1.msra.mxu0 0.0
  %93 = vmatprep.subr.mxu0 0.0
  %94 = vmatpush1.msra.mxu0 0.0
  %95 = vmatprep.mubr.f32.mxu0 0.0
  %96 = vmatmul.mubr.f32.gmra.mrb[0].mxu0 %v29
  %v97 = vpop.f32.mrb[0].mxu0
  %v98 = vadd.f32 0.0, %v97
  %v99 = vpop.f32.mrb[0].mxu0
  %100 = vdwg.mxu0
  %v101 = vadd.f32 %v26, %v98
  %v102 = vxor.u32 %v101, 2147483648
  %v103 = vmul.f32 %v102, 1.442695
  %v104 = vpow.pop %v103
  %v105 = vadd.f32 %v104, 1.0
  %v106 = vrcp.pop %v105
  %v107 = vmul.f32 1.0, %v106
  %v108 = vtanh.pop %v101
  %110 = vrot.lane.b32.xlu0 %v25, 32
  %v111 = vpop.permute.xlu0 %110
  %v113 = vmul.f32 %v107, %v111
  %115 = vrot.lane.b32.xlu0 %v108, 64
  %v116 = vpop.permute.xlu0 %115
  %v118 = vmul.f32 %v107, %v116
  %120 = vrot.lane.b32.xlu0 %v118, 32
  %v121 = vpop.permute.xlu0 %120
  %v123 = vadd.f32 %v113, %v121
  %v124 = vtanh.pop %v123
  %126 = vrot.lane.b32.xlu0 %v124, 64
  %v127 = vpop.permute.xlu0 %126
  %v129 = vmul.f32 %v107, %v127
  %131 = vrot.lane.b32.xlu0 %v129, 32
  %v132 = vpop.permute.xlu0 %131
  %134 = vst.msk [vmem:[%s4] sm:$0xff] %vm27, %v132
  %s135 = scalar_lea.vmem %s0, 8
  %v136 = vld [vmem:[%s135] sm:$0xff]
  %v137 = vsel %vm27, %v132, 0
  %139 = vmatprep.subr.mxu0 0.0
  %140 = vmatpush1.msra.mxu0 %v20
  %141 = vmatprep.subr.mxu0 0.0
  %142 = vmatpush1.msra.mxu0 %v21
  %143 = vmatprep.subr.mxu0 0.0
  %144 = vmatpush1.msra.mxu0 %v22
  %145 = vmatprep.subr.mxu0 0.0
  %146 = vmatpush1.msra.mxu0 %v23
  %147 = vmatprep.subr.mxu0 0.0
  %148 = vmatpush1.msra.mxu0 0.0
  %149 = vmatprep.subr.mxu0 0.0
  %150 = vmatpush1.msra.mxu0 0.0
  %151 = vmatprep.subr.mxu0 0.0
  %152 = vmatpush1.msra.mxu0 0.0
  %153 = vmatprep.subr.mxu0 0.0
  %154 = vmatpush1.msra.mxu0 0.0
  %155 = vmatprep.subr.mxu0 0.0
  %156 = vmatpush1.msra.mxu0 0.0
  %157 = vmatprep.subr.mxu0 0.0
  %158 = vmatpush1.msra.mxu0 0.0
  %159 = vmatprep.subr.mxu0 0.0
  %160 = vmatpush1.msra.mxu0 0.0
  %161 = vmatprep.subr.mxu0 0.0
  %162 = vmatpush1.msra.mxu0 0.0
  %163 = vmatprep.subr.mxu0 0.0
  %164 = vmatpush1.msra.mxu0 0.0
  %165 = vmatprep.subr.mxu0 0.0
  %166 = vmatpush1.msra.mxu0 0.0
  %167 = vmatprep.subr.mxu0 0.0
  %168 = vmatpush1.msra.mxu0 0.0
  %169 = vmatprep.subr.mxu0 0.0
  %170 = vmatpush1.msra.mxu0 0.0
  %171 = vmatprep.subr.mxu0 0.0
  %172 = vmatpush1.msra.mxu0 0.0
  %173 = vmatprep.subr.mxu0 0.0
  %174 = vmatpush1.msra.mxu0 0.0
  %175 = vmatprep.subr.mxu0 0.0
  %176 = vmatpush1.msra.mxu0 0.0
  %177 = vmatprep.subr.mxu0 0.0
  %178 = vmatpush1.msra.mxu0 0.0
  %179 = vmatprep.subr.mxu0 0.0
  %180 = vmatpush1.msra.mxu0 0.0
  %181 = vmatprep.subr.mxu0 0.0
  %182 = vmatpush1.msra.mxu0 0.0
  %183 = vmatprep.subr.mxu0 0.0
  %184 = vmatpush1.msra.mxu0 0.0
  %185 = vmatprep.subr.mxu0 0.0
  %186 = vmatpush1.msra.mxu0 0.0
  %187 = vmatprep.subr.mxu0 0.0
  %188 = vmatpush1.msra.mxu0 0.0
  %189 = vmatprep.subr.mxu0 0.0
  %190 = vmatpush1.msra.mxu0 0.0
  %191 = vmatprep.subr.mxu0 0.0
  %192 = vmatpush1.msra.mxu0 0.0
  %193 = vmatprep.subr.mxu0 0.0
  %194 = vmatpush1.msra.mxu0 0.0
  %195 = vmatprep.subr.mxu0 0.0
  %196 = vmatpush1.msra.mxu0 0.0
  %197 = vmatprep.subr.mxu0 0.0
  %198 = vmatpush1.msra.mxu0 0.0
  %199 = vmatprep.subr.mxu0 0.0
  %200 = vmatpush1.msra.mxu0 0.0
  %201 = vmatprep.subr.mxu0 0.0
  %202 = vmatpush1.msra.mxu0 0.0
  %203 = vmatprep.mubr.f32.mxu0 0.0
  %204 = vmatmul.mubr.f32.gmra.mrb[0].mxu0 %v137
  %v205 = vpop.f32.mrb[0].mxu0
  %v206 = vadd.f32 0.0, %v205
  %v207 = vpop.f32.mrb[0].mxu0
  %208 = vdwg.mxu0
  %v209 = vadd.f32 %v136, %v206
  %v210 = vxor.u32 %v209, 2147483648
  %v211 = vmul.f32 %v210, 1.442695
  %v212 = vpow.pop %v211
  %v213 = vadd.f32 %v212, 1.0
  %v214 = vrcp.pop %v213
  %v215 = vmul.f32 1.0, %v214
  %v216 = vtanh.pop %v209
  %v217 = vmul.f32 %v215, %v123
  %219 = vrot.lane.b32.xlu0 %v216, 64
  %v220 = vpop.permute.xlu0 %219
  %v222 = vmul.f32 %v215, %v220
  %224 = vrot.lane.b32.xlu0 %v222, 32
  %v225 = vpop.permute.xlu0 %224
  %v227 = vadd.f32 %v217, %v225
  %v228 = vtanh.pop %v227
  %230 = vrot.lane.b32.xlu0 %v228, 64
  %v231 = vpop.permute.xlu0 %230
  %v233 = vmul.f32 %v215, %v231
  %235 = vrot.lane.b32.xlu0 %v233, 32
  %v236 = vpop.permute.xlu0 %235
  %s238 = scalar_lea.vmem %s4, 8
  %239 = vst.msk [vmem:[%s238] sm:$0xff] %vm27, %v236
  %s240 = scalar_lea.vmem %s0, 16
  %v241 = vld [vmem:[%s240] sm:$0xff]
  %v242 = vsel %vm27, %v236, 0
  %244 = vmatprep.subr.mxu0 0.0
  %245 = vmatpush1.msra.mxu0 %v20
  %246 = vmatprep.subr.mxu0 0.0
  %247 = vmatpush1.msra.mxu0 %v21
  %248 = vmatprep.subr.mxu0 0.0
  %249 = vmatpush1.msra.mxu0 %v22
  %250 = vmatprep.subr.mxu0 0.0
  %251 = vmatpush1.msra.mxu0 %v23
  %252 = vmatprep.subr.mxu0 0.0
  %253 = vmatpush1.msra.mxu0 0.0
  %254 = vmatprep.subr.mxu0 0.0
  %255 = vmatpush1.msra.mxu0 0.0
  %256 = vmatprep.subr.mxu0 0.0
  %257 = vmatpush1.msra.mxu0 0.0
  %258 = vmatprep.subr.mxu0 0.0
  %259 = vmatpush1.msra.mxu0 0.0
  %260 = vmatprep.subr.mxu0 0.0
  %261 = vmatpush1.msra.mxu0 0.0
  %262 = vmatprep.subr.mxu0 0.0
  %263 = vmatpush1.msra.mxu0 0.0
  %264 = vmatprep.subr.mxu0 0.0
  %265 = vmatpush1.msra.mxu0 0.0
  %266 = vmatprep.subr.mxu0 0.0
  %267 = vmatpush1.msra.mxu0 0.0
  %268 = vmatprep.subr.mxu0 0.0
  %269 = vmatpush1.msra.mxu0 0.0
  %270 = vmatprep.subr.mxu0 0.0
  %271 = vmatpush1.msra.mxu0 0.0
  %272 = vmatprep.subr.mxu0 0.0
  %273 = vmatpush1.msra.mxu0 0.0
  %274 = vmatprep.subr.mxu0 0.0
  %275 = vmatpush1.msra.mxu0 0.0
  %276 = vmatprep.subr.mxu0 0.0
  %277 = vmatpush1.msra.mxu0 0.0
  %278 = vmatprep.subr.mxu0 0.0
  %279 = vmatpush1.msra.mxu0 0.0
  %280 = vmatprep.subr.mxu0 0.0
  %281 = vmatpush1.msra.mxu0 0.0
  %282 = vmatprep.subr.mxu0 0.0
  %283 = vmatpush1.msra.mxu0 0.0
  %284 = vmatprep.subr.mxu0 0.0
  %285 = vmatpush1.msra.mxu0 0.0
  %286 = vmatprep.subr.mxu0 0.0
  %287 = vmatpush1.msra.mxu0 0.0
  %288 = vmatprep.subr.mxu0 0.0
  %289 = vmatpush1.msra.mxu0 0.0
  %290 = vmatprep.subr.mxu0 0.0
  %291 = vmatpush1.msra.mxu0 0.0
  %292 = vmatprep.subr.mxu0 0.0
  %293 = vmatpush1.msra.mxu0 0.0
  %294 = vmatprep.subr.mxu0 0.0
  %295 = vmatpush1.msra.mxu0 0.0
  %296 = vmatprep.subr.mxu0 0.0
  %297 = vmatpush1.msra.mxu0 0.0
  %298 = vmatprep.subr.mxu0 0.0
  %299 = vmatpush1.msra.mxu0 0.0
  %300 = vmatprep.subr.mxu0 0.0
  %301 = vmatpush1.msra.mxu0 0.0
  %302 = vmatprep.subr.mxu0 0.0
  %303 = vmatpush1.msra.mxu0 0.0
  %304 = vmatprep.subr.mxu0 0.0
  %305 = vmatpush1.msra.mxu0 0.0
  %306 = vmatprep.subr.mxu0 0.0
  %307 = vmatpush1.msra.mxu0 0.0
  %308 = vmatprep.mubr.f32.mxu0 0.0
  %309 = vmatmul.mubr.f32.gmra.mrb[0].mxu0 %v242
  %v310 = vpop.f32.mrb[0].mxu0
  %v311 = vadd.f32 0.0, %v310
  %v312 = vpop.f32.mrb[0].mxu0
  %313 = vdwg.mxu0
  %v314 = vadd.f32 %v241, %v311
  %v315 = vxor.u32 %v314, 2147483648
  %v316 = vmul.f32 %v315, 1.442695
  %v317 = vpow.pop %v316
  %v318 = vadd.f32 %v317, 1.0
  %v319 = vrcp.pop %v318
  %v320 = vmul.f32 1.0, %v319
  %v321 = vtanh.pop %v314
  %v322 = vmul.f32 %v320, %v227
  %324 = vrot.lane.b32.xlu0 %v321, 64
  %v325 = vpop.permute.xlu0 %324
  %v327 = vmul.f32 %v320, %v325
  %329 = vrot.lane.b32.xlu0 %v327, 32
  %v330 = vpop.permute.xlu0 %329
  %v332 = vadd.f32 %v322, %v330
  %v333 = vtanh.pop %v332
  %335 = vrot.lane.b32.xlu0 %v333, 64
  %v336 = vpop.permute.xlu0 %335
  %v338 = vmul.f32 %v320, %v336
  %340 = vrot.lane.b32.xlu0 %v338, 32
  %v341 = vpop.permute.xlu0 %340
  %s343 = scalar_lea.vmem %s4, 16
  %344 = vst.msk [vmem:[%s343] sm:$0xff] %vm27, %v341
  %s345 = scalar_lea.vmem %s0, 24
  %v346 = vld [vmem:[%s345] sm:$0xff]
  %v347 = vsel %vm27, %v341, 0
  %349 = vmatprep.subr.mxu0 0.0
  %350 = vmatpush1.msra.mxu0 %v20
  %351 = vmatprep.subr.mxu0 0.0
  %352 = vmatpush1.msra.mxu0 %v21
  %353 = vmatprep.subr.mxu0 0.0
  %354 = vmatpush1.msra.mxu0 %v22
  %355 = vmatprep.subr.mxu0 0.0
  %356 = vmatpush1.msra.mxu0 %v23
  %357 = vmatprep.subr.mxu0 0.0
  %358 = vmatpush1.msra.mxu0 0.0
  %359 = vmatprep.subr.mxu0 0.0
  %360 = vmatpush1.msra.mxu0 0.0
  %361 = vmatprep.subr.mxu0 0.0
  %362 = vmatpush1.msra.mxu0 0.0
  %363 = vmatprep.subr.mxu0 0.0
  %364 = vmatpush1.msra.mxu0 0.0
  %365 = vmatprep.subr.mxu0 0.0
  %366 = vmatpush1.msra.mxu0 0.0
  %367 = vmatprep.subr.mxu0 0.0
  %368 = vmatpush1.msra.mxu0 0.0
  %369 = vmatprep.subr.mxu0 0.0
  %370 = vmatpush1.msra.mxu0 0.0
  %371 = vmatprep.subr.mxu0 0.0
  %372 = vmatpush1.msra.mxu0 0.0
  %373 = vmatprep.subr.mxu0 0.0
  %374 = vmatpush1.msra.mxu0 0.0
  %375 = vmatprep.subr.mxu0 0.0
  %376 = vmatpush1.msra.mxu0 0.0
  %377 = vmatprep.subr.mxu0 0.0
  %378 = vmatpush1.msra.mxu0 0.0
  %379 = vmatprep.subr.mxu0 0.0
  %380 = vmatpush1.msra.mxu0 0.0
  %381 = vmatprep.subr.mxu0 0.0
  %382 = vmatpush1.msra.mxu0 0.0
  %383 = vmatprep.subr.mxu0 0.0
  %384 = vmatpush1.msra.mxu0 0.0
  %385 = vmatprep.subr.mxu0 0.0
  %386 = vmatpush1.msra.mxu0 0.0
  %387 = vmatprep.subr.mxu0 0.0
  %388 = vmatpush1.msra.mxu0 0.0
  %389 = vmatprep.subr.mxu0 0.0
  %390 = vmatpush1.msra.mxu0 0.0
  %391 = vmatprep.subr.mxu0 0.0
  %392 = vmatpush1.msra.mxu0 0.0
  %393 = vmatprep.subr.mxu0 0.0
  %394 = vmatpush1.msra.mxu0 0.0
  %395 = vmatprep.subr.mxu0 0.0
  %396 = vmatpush1.msra.mxu0 0.0
  %397 = vmatprep.subr.mxu0 0.0
  %398 = vmatpush1.msra.mxu0 0.0
  %399 = vmatprep.subr.mxu0 0.0
  %400 = vmatpush1.msra.mxu0 0.0
  %401 = vmatprep.subr.mxu0 0.0
  %402 = vmatpush1.msra.mxu0 0.0
  %403 = vmatprep.subr.mxu0 0.0
  %404 = vmatpush1.msra.mxu0 0.0
  %405 = vmatprep.subr.mxu0 0.0
  %406 = vmatpush1.msra.mxu0 0.0
  %407 = vmatprep.subr.mxu0 0.0
  %408 = vmatpush1.msra.mxu0 0.0
  %409 = vmatprep.subr.mxu0 0.0
  %410 = vmatpush1.msra.mxu0 0.0
  %411 = vmatprep.subr.mxu0 0.0
  %412 = vmatpush1.msra.mxu0 0.0
  %413 = vmatprep.mubr.f32.mxu0 0.0
  %414 = vmatmul.mubr.f32.gmra.mrb[0].mxu0 %v347
  %v415 = vpop.f32.mrb[0].mxu0
  %v416 = vadd.f32 0.0, %v415
  %v417 = vpop.f32.mrb[0].mxu0
  %418 = vdwg.mxu0
  %v419 = vadd.f32 %v346, %v416
  %v420 = vxor.u32 %v419, 2147483648
  %v421 = vmul.f32 %v420, 1.442695
  %v422 = vpow.pop %v421
  %v423 = vadd.f32 %v422, 1.0
  %v424 = vrcp.pop %v423
  %v425 = vmul.f32 1.0, %v424
  %v426 = vtanh.pop %v419
  %v427 = vmul.f32 %v425, %v332
  %429 = vrot.lane.b32.xlu0 %v426, 64
  %v430 = vpop.permute.xlu0 %429
  %v432 = vmul.f32 %v425, %v430
  %434 = vrot.lane.b32.xlu0 %v432, 32
  %v435 = vpop.permute.xlu0 %434
  %v437 = vadd.f32 %v427, %v435
  %v438 = vtanh.pop %v437
  %440 = vrot.lane.b32.xlu0 %v438, 64
  %v441 = vpop.permute.xlu0 %440
  %v443 = vmul.f32 %v425, %v441
  %445 = vrot.lane.b32.xlu0 %v443, 32
  %v446 = vpop.permute.xlu0 %445
  %s448 = scalar_lea.vmem %s4, 24
  %449 = vst.msk [vmem:[%s448] sm:$0xff] %vm27, %v446
  %s450 = scalar_lea.vmem %s0, 32
  %v451 = vld [vmem:[%s450] sm:$0xff]
  %v452 = vsel %vm27, %v446, 0
  %454 = vmatprep.subr.mxu0 0.0
  %455 = vmatpush1.msra.mxu0 %v20
  %456 = vmatprep.subr.mxu0 0.0
  %457 = vmatpush1.msra.mxu0 %v21
  %458 = vmatprep.subr.mxu0 0.0
  %459 = vmatpush1.msra.mxu0 %v22
  %460 = vmatprep.subr.mxu0 0.0
  %461 = vmatpush1.msra.mxu0 %v23
  %462 = vmatprep.subr.mxu0 0.0
  %463 = vmatpush1.msra.mxu0 0.0
  %464 = vmatprep.subr.mxu0 0.0
  %465 = vmatpush1.msra.mxu0 0.0
  %466 = vmatprep.subr.mxu0 0.0
  %467 = vmatpush1.msra.mxu0 0.0
  %468 = vmatprep.subr.mxu0 0.0
  %469 = vmatpush1.msra.mxu0 0.0
  %470 = vmatprep.subr.mxu0 0.0
  %471 = vmatpush1.msra.mxu0 0.0
  %472 = vmatprep.subr.mxu0 0.0
  %473 = vmatpush1.msra.mxu0 0.0
  %474 = vmatprep.subr.mxu0 0.0
  %475 = vmatpush1.msra.mxu0 0.0
  %476 = vmatprep.subr.mxu0 0.0
  %477 = vmatpush1.msra.mxu0 0.0
  %478 = vmatprep.subr.mxu0 0.0
  %479 = vmatpush1.msra.mxu0 0.0
  %480 = vmatprep.subr.mxu0 0.0
  %481 = vmatpush1.msra.mxu0 0.0
  %482 = vmatprep.subr.mxu0 0.0
  %483 = vmatpush1.msra.mxu0 0.0
  %484 = vmatprep.subr.mxu0 0.0
  %485 = vmatpush1.msra.mxu0 0.0
  %486 = vmatprep.subr.mxu0 0.0
  %487 = vmatpush1.msra.mxu0 0.0
  %488 = vmatprep.subr.mxu0 0.0
  %489 = vmatpush1.msra.mxu0 0.0
  %490 = vmatprep.subr.mxu0 0.0
  %491 = vmatpush1.msra.mxu0 0.0
  %492 = vmatprep.subr.mxu0 0.0
  %493 = vmatpush1.msra.mxu0 0.0
  %494 = vmatprep.subr.mxu0 0.0
  %495 = vmatpush1.msra.mxu0 0.0
  %496 = vmatprep.subr.mxu0 0.0
  %497 = vmatpush1.msra.mxu0 0.0
  %498 = vmatprep.subr.mxu0 0.0
  %499 = vmatpush1.msra.mxu0 0.0
  %500 = vmatprep.subr.mxu0 0.0
  %501 = vmatpush1.msra.mxu0 0.0
  %502 = vmatprep.subr.mxu0 0.0
  %503 = vmatpush1.msra.mxu0 0.0
  %504 = vmatprep.subr.mxu0 0.0
  %505 = vmatpush1.msra.mxu0 0.0
  %506 = vmatprep.subr.mxu0 0.0
  %507 = vmatpush1.msra.mxu0 0.0
  %508 = vmatprep.subr.mxu0 0.0
  %509 = vmatpush1.msra.mxu0 0.0
  %510 = vmatprep.subr.mxu0 0.0
  %511 = vmatpush1.msra.mxu0 0.0
  %512 = vmatprep.subr.mxu0 0.0
  %513 = vmatpush1.msra.mxu0 0.0
  %514 = vmatprep.subr.mxu0 0.0
  %515 = vmatpush1.msra.mxu0 0.0
  %516 = vmatprep.subr.mxu0 0.0
  %517 = vmatpush1.msra.mxu0 0.0
  %518 = vmatprep.mubr.f32.mxu0 0.0
  %519 = vmatmul.mubr.f32.gmra.mrb[0].mxu0 %v452
  %v520 = vpop.f32.mrb[0].mxu0
  %v521 = vadd.f32 0.0, %v520
  %v522 = vpop.f32.mrb[0].mxu0
  %523 = vdwg.mxu0
  %v524 = vadd.f32 %v451, %v521
  %v525 = vxor.u32 %v524, 2147483648
  %v526 = vmul.f32 %v525, 1.442695
  %v527 = vpow.pop %v526
  %v528 = vadd.f32 %v527, 1.0
  %v529 = vrcp.pop %v528
  %v530 = vmul.f32 1.0, %v529
  %v531 = vtanh.pop %v524
  %v532 = vmul.f32 %v530, %v437
  %534 = vrot.lane.b32.xlu0 %v531, 64
  %v535 = vpop.permute.xlu0 %534
  %v537 = vmul.f32 %v530, %v535
  %539 = vrot.lane.b32.xlu0 %v537, 32
  %v540 = vpop.permute.xlu0 %539
  %v542 = vadd.f32 %v532, %v540
  %v543 = vtanh.pop %v542
  %545 = vrot.lane.b32.xlu0 %v543, 64
  %v546 = vpop.permute.xlu0 %545
  %v548 = vmul.f32 %v530, %v546
  %550 = vrot.lane.b32.xlu0 %v548, 32
  %v551 = vpop.permute.xlu0 %550
  %s553 = scalar_lea.vmem %s4, 32
  %554 = vst.msk [vmem:[%s553] sm:$0xff] %vm27, %v551
  %s555 = scalar_lea.vmem %s0, 40
  %v556 = vld [vmem:[%s555] sm:$0xff]
  %v557 = vsel %vm27, %v551, 0
  %559 = vmatprep.subr.mxu0 0.0
  %560 = vmatpush1.msra.mxu0 %v20
  %561 = vmatprep.subr.mxu0 0.0
  %562 = vmatpush1.msra.mxu0 %v21
  %563 = vmatprep.subr.mxu0 0.0
  %564 = vmatpush1.msra.mxu0 %v22
  %565 = vmatprep.subr.mxu0 0.0
  %566 = vmatpush1.msra.mxu0 %v23
  %567 = vmatprep.subr.mxu0 0.0
  %568 = vmatpush1.msra.mxu0 0.0
  %569 = vmatprep.subr.mxu0 0.0
  %570 = vmatpush1.msra.mxu0 0.0
  %571 = vmatprep.subr.mxu0 0.0
  %572 = vmatpush1.msra.mxu0 0.0
  %573 = vmatprep.subr.mxu0 0.0
  %574 = vmatpush1.msra.mxu0 0.0
  %575 = vmatprep.subr.mxu0 0.0
  %576 = vmatpush1.msra.mxu0 0.0
  %577 = vmatprep.subr.mxu0 0.0
  %578 = vmatpush1.msra.mxu0 0.0
  %579 = vmatprep.subr.mxu0 0.0
  %580 = vmatpush1.msra.mxu0 0.0
  %581 = vmatprep.subr.mxu0 0.0
  %582 = vmatpush1.msra.mxu0 0.0
  %583 = vmatprep.subr.mxu0 0.0
  %584 = vmatpush1.msra.mxu0 0.0
  %585 = vmatprep.subr.mxu0 0.0
  %586 = vmatpush1.msra.mxu0 0.0
  %587 = vmatprep.subr.mxu0 0.0
  %588 = vmatpush1.msra.mxu0 0.0
  %589 = vmatprep.subr.mxu0 0.0
  %590 = vmatpush1.msra.mxu0 0.0
  %591 = vmatprep.subr.mxu0 0.0
  %592 = vmatpush1.msra.mxu0 0.0
  %593 = vmatprep.subr.mxu0 0.0
  %594 = vmatpush1.msra.mxu0 0.0
  %595 = vmatprep.subr.mxu0 0.0
  %596 = vmatpush1.msra.mxu0 0.0
  %597 = vmatprep.subr.mxu0 0.0
  %598 = vmatpush1.msra.mxu0 0.0
  %599 = vmatprep.subr.mxu0 0.0
  %600 = vmatpush1.msra.mxu0 0.0
  %601 = vmatprep.subr.mxu0 0.0
  %602 = vmatpush1.msra.mxu0 0.0
  %603 = vmatprep.subr.mxu0 0.0
  %604 = vmatpush1.msra.mxu0 0.0
  %605 = vmatprep.subr.mxu0 0.0
  %606 = vmatpush1.msra.mxu0 0.0
  %607 = vmatprep.subr.mxu0 0.0
  %608 = vmatpush1.msra.mxu0 0.0
  %609 = vmatprep.subr.mxu0 0.0
  %610 = vmatpush1.msra.mxu0 0.0
  %611 = vmatprep.subr.mxu0 0.0
  %612 = vmatpush1.msra.mxu0 0.0
  %613 = vmatprep.subr.mxu0 0.0
  %614 = vmatpush1.msra.mxu0 0.0
  %615 = vmatprep.subr.mxu0 0.0
  %616 = vmatpush1.msra.mxu0 0.0
  %617 = vmatprep.subr.mxu0 0.0
  %618 = vmatpush1.msra.mxu0 0.0
  %619 = vmatprep.subr.mxu0 0.0
  %620 = vmatpush1.msra.mxu0 0.0
  %621 = vmatprep.subr.mxu0 0.0
  %622 = vmatpush1.msra.mxu0 0.0
  %623 = vmatprep.mubr.f32.mxu0 0.0
  %624 = vmatmul.mubr.f32.gmra.mrb[0].mxu0 %v557
  %v625 = vpop.f32.mrb[0].mxu0
  %v626 = vadd.f32 0.0, %v625
  %v627 = vpop.f32.mrb[0].mxu0
  %628 = vdwg.mxu0
  %v629 = vadd.f32 %v556, %v626
  %v630 = vxor.u32 %v629, 2147483648
  %v631 = vmul.f32 %v630, 1.442695
  %v632 = vpow.pop %v631
  %v633 = vadd.f32 %v632, 1.0
  %v634 = vrcp.pop %v633
  %v635 = vmul.f32 1.0, %v634
  %v636 = vtanh.pop %v629
  %v637 = vmul.f32 %v635, %v542
  %639 = vrot.lane.b32.xlu0 %v636, 64
  %v640 = vpop.permute.xlu0 %639
  %v642 = vmul.f32 %v635, %v640
  %644 = vrot.lane.b32.xlu0 %v642, 32
  %v645 = vpop.permute.xlu0 %644
  %v647 = vadd.f32 %v637, %v645
  %v648 = vtanh.pop %v647
  %650 = vrot.lane.b32.xlu0 %v648, 64
  %v651 = vpop.permute.xlu0 %650
  %v653 = vmul.f32 %v635, %v651
  %655 = vrot.lane.b32.xlu0 %v653, 32
  %v656 = vpop.permute.xlu0 %655
  %s658 = scalar_lea.vmem %s4, 40
  %659 = vst.msk [vmem:[%s658] sm:$0xff] %vm27, %v656
  %s660 = scalar_lea.vmem %s0, 48
  %v661 = vld [vmem:[%s660] sm:$0xff]
  %v662 = vsel %vm27, %v656, 0
  %664 = vmatprep.subr.mxu0 0.0
  %665 = vmatpush1.msra.mxu0 %v20
  %666 = vmatprep.subr.mxu0 0.0
  %667 = vmatpush1.msra.mxu0 %v21
  %668 = vmatprep.subr.mxu0 0.0
  %669 = vmatpush1.msra.mxu0 %v22
  %670 = vmatprep.subr.mxu0 0.0
  %671 = vmatpush1.msra.mxu0 %v23
  %672 = vmatprep.subr.mxu0 0.0
  %673 = vmatpush1.msra.mxu0 0.0
  %674 = vmatprep.subr.mxu0 0.0
  %675 = vmatpush1.msra.mxu0 0.0
  %676 = vmatprep.subr.mxu0 0.0
  %677 = vmatpush1.msra.mxu0 0.0
  %678 = vmatprep.subr.mxu0 0.0
  %679 = vmatpush1.msra.mxu0 0.0
  %680 = vmatprep.subr.mxu0 0.0
  %681 = vmatpush1.msra.mxu0 0.0
  %682 = vmatprep.subr.mxu0 0.0
  %683 = vmatpush1.msra.mxu0 0.0
  %684 = vmatprep.subr.mxu0 0.0
  %685 = vmatpush1.msra.mxu0 0.0
  %686 = vmatprep.subr.mxu0 0.0
  %687 = vmatpush1.msra.mxu0 0.0
  %688 = vmatprep.subr.mxu0 0.0
  %689 = vmatpush1.msra.mxu0 0.0
  %690 = vmatprep.subr.mxu0 0.0
  %691 = vmatpush1.msra.mxu0 0.0
  %692 = vmatprep.subr.mxu0 0.0
  %693 = vmatpush1.msra.mxu0 0.0
  %694 = vmatprep.subr.mxu0 0.0
  %695 = vmatpush1.msra.mxu0 0.0
  %696 = vmatprep.subr.mxu0 0.0
  %697 = vmatpush1.msra.mxu0 0.0
  %698 = vmatprep.subr.mxu0 0.0
  %699 = vmatpush1.msra.mxu0 0.0
  %700 = vmatprep.subr.mxu0 0.0
  %701 = vmatpush1.msra.mxu0 0.0
  %702 = vmatprep.subr.mxu0 0.0
  %703 = vmatpush1.msra.mxu0 0.0
  %704 = vmatprep.subr.mxu0 0.0
  %705 = vmatpush1.msra.mxu0 0.0
  %706 = vmatprep.subr.mxu0 0.0
  %707 = vmatpush1.msra.mxu0 0.0
  %708 = vmatprep.subr.mxu0 0.0
  %709 = vmatpush1.msra.mxu0 0.0
  %710 = vmatprep.subr.mxu0 0.0
  %711 = vmatpush1.msra.mxu0 0.0
  %712 = vmatprep.subr.mxu0 0.0
  %713 = vmatpush1.msra.mxu0 0.0
  %714 = vmatprep.subr.mxu0 0.0
  %715 = vmatpush1.msra.mxu0 0.0
  %716 = vmatprep.subr.mxu0 0.0
  %717 = vmatpush1.msra.mxu0 0.0
  %718 = vmatprep.subr.mxu0 0.0
  %719 = vmatpush1.msra.mxu0 0.0
  %720 = vmatprep.subr.mxu0 0.0
  %721 = vmatpush1.msra.mxu0 0.0
  %722 = vmatprep.subr.mxu0 0.0
  %723 = vmatpush1.msra.mxu0 0.0
  %724 = vmatprep.subr.mxu0 0.0
  %725 = vmatpush1.msra.mxu0 0.0
  %726 = vmatprep.subr.mxu0 0.0
  %727 = vmatpush1.msra.mxu0 0.0
  %728 = vmatprep.mubr.f32.mxu0 0.0
  %729 = vmatmul.mubr.f32.gmra.mrb[0].mxu0 %v662
  %v730 = vpop.f32.mrb[0].mxu0
  %v731 = vadd.f32 0.0, %v730
  %v732 = vpop.f32.mrb[0].mxu0
  %733 = vdwg.mxu0
  %v734 = vadd.f32 %v661, %v731
  %v735 = vxor.u32 %v734, 2147483648
  %v736 = vmul.f32 %v735, 1.442695
  %v737 = vpow.pop %v736
  %v738 = vadd.f32 %v737, 1.0
  %v739 = vrcp.pop %v738
  %v740 = vmul.f32 1.0, %v739
  %v741 = vtanh.pop %v734
  %v742 = vmul.f32 %v740, %v647
  %744 = vrot.lane.b32.xlu0 %v741, 64
  %v745 = vpop.permute.xlu0 %744
  %v747 = vmul.f32 %v740, %v745
  %749 = vrot.lane.b32.xlu0 %v747, 32
  %v750 = vpop.permute.xlu0 %749
  %v752 = vadd.f32 %v742, %v750
  %v753 = vtanh.pop %v752
  %755 = vrot.lane.b32.xlu0 %v753, 64
  %v756 = vpop.permute.xlu0 %755
  %v758 = vmul.f32 %v740, %v756
  %760 = vrot.lane.b32.xlu0 %v758, 32
  %v761 = vpop.permute.xlu0 %760
  %s763 = scalar_lea.vmem %s4, 48
  %764 = vst.msk [vmem:[%s763] sm:$0xff] %vm27, %v761
  %s765 = scalar_lea.vmem %s0, 56
  %v766 = vld [vmem:[%s765] sm:$0xff]
  %v767 = vsel %vm27, %v761, 0
  %769 = vmatprep.subr.mxu0 0.0
  %770 = vmatpush1.msra.mxu0 %v20
  %771 = vmatprep.subr.mxu0 0.0
  %772 = vmatpush1.msra.mxu0 %v21
  %773 = vmatprep.subr.mxu0 0.0
  %774 = vmatpush1.msra.mxu0 %v22
  %775 = vmatprep.subr.mxu0 0.0
  %776 = vmatpush1.msra.mxu0 %v23
  %777 = vmatprep.subr.mxu0 0.0
  %778 = vmatpush1.msra.mxu0 0.0
  %779 = vmatprep.subr.mxu0 0.0
  %780 = vmatpush1.msra.mxu0 0.0
  %781 = vmatprep.subr.mxu0 0.0
  %782 = vmatpush1.msra.mxu0 0.0
  %783 = vmatprep.subr.mxu0 0.0
  %784 = vmatpush1.msra.mxu0 0.0
  %785 = vmatprep.subr.mxu0 0.0
  %786 = vmatpush1.msra.mxu0 0.0
  %787 = vmatprep.subr.mxu0 0.0
  %788 = vmatpush1.msra.mxu0 0.0
  %789 = vmatprep.subr.mxu0 0.0
  %790 = vmatpush1.msra.mxu0 0.0
  %791 = vmatprep.subr.mxu0 0.0
  %792 = vmatpush1.msra.mxu0 0.0
  %793 = vmatprep.subr.mxu0 0.0
  %794 = vmatpush1.msra.mxu0 0.0
  %795 = vmatprep.subr.mxu0 0.0
  %796 = vmatpush1.msra.mxu0 0.0
  %797 = vmatprep.subr.mxu0 0.0
  %798 = vmatpush1.msra.mxu0 0.0
  %799 = vmatprep.subr.mxu0 0.0
  %800 = vmatpush1.msra.mxu0 0.0
  %801 = vmatprep.subr.mxu0 0.0
  %802 = vmatpush1.msra.mxu0 0.0
  %803 = vmatprep.subr.mxu0 0.0
  %804 = vmatpush1.msra.mxu0 0.0
  %805 = vmatprep.subr.mxu0 0.0
  %806 = vmatpush1.msra.mxu0 0.0
  %807 = vmatprep.subr.mxu0 0.0
  %808 = vmatpush1.msra.mxu0 0.0
  %809 = vmatprep.subr.mxu0 0.0
  %810 = vmatpush1.msra.mxu0 0.0
  %811 = vmatprep.subr.mxu0 0.0
  %812 = vmatpush1.msra.mxu0 0.0
  %813 = vmatprep.subr.mxu0 0.0
  %814 = vmatpush1.msra.mxu0 0.0
  %815 = vmatprep.subr.mxu0 0.0
  %816 = vmatpush1.msra.mxu0 0.0
  %817 = vmatprep.subr.mxu0 0.0
  %818 = vmatpush1.msra.mxu0 0.0
  %819 = vmatprep.subr.mxu0 0.0
  %820 = vmatpush1.msra.mxu0 0.0
  %821 = vmatprep.subr.mxu0 0.0
  %822 = vmatpush1.msra.mxu0 0.0
  %823 = vmatprep.subr.mxu0 0.0
  %824 = vmatpush1.msra.mxu0 0.0
  %825 = vmatprep.subr.mxu0 0.0
  %826 = vmatpush1.msra.mxu0 0.0
  %827 = vmatprep.subr.mxu0 0.0
  %828 = vmatpush1.msra.mxu0 0.0
  %829 = vmatprep.subr.mxu0 0.0
  %830 = vmatpush1.msra.mxu0 0.0
  %831 = vmatprep.subr.mxu0 0.0
  %832 = vmatpush1.msra.mxu0 0.0
  %833 = vmatprep.mubr.f32.mxu0 0.0
  %834 = vmatmul.mubr.f32.gmra.mrb[0].mxu0 %v767
  %v835 = vpop.f32.mrb[0].mxu0
  %v836 = vadd.f32 0.0, %v835
  %v837 = vpop.f32.mrb[0].mxu0
  %838 = vdwg.mxu0
  %v839 = vadd.f32 %v766, %v836
  %v840 = vxor.u32 %v839, 2147483648
  %v841 = vmul.f32 %v840, 1.442695
  %v842 = vpow.pop %v841
  %v843 = vadd.f32 %v842, 1.0
  %v844 = vrcp.pop %v843
  %v845 = vmul.f32 1.0, %v844
  %v846 = vtanh.pop %v839
  %v847 = vmul.f32 %v845, %v752
  %849 = vrot.lane.b32.xlu0 %v846, 64
  %v850 = vpop.permute.xlu0 %849
  %v852 = vmul.f32 %v845, %v850
  %854 = vrot.lane.b32.xlu0 %v852, 32
  %v855 = vpop.permute.xlu0 %854
  %v857 = vadd.f32 %v847, %v855
  %v858 = vtanh.pop %v857
  %860 = vrot.lane.b32.xlu0 %v858, 64
  %v861 = vpop.permute.xlu0 %860
  %v863 = vmul.f32 %v845, %v861
  %865 = vrot.lane.b32.xlu0 %v863, 32
  %v866 = vpop.permute.xlu0 %865
  %s868 = scalar_lea.vmem %s4, 56
  %869 = vst.msk [vmem:[%s868] sm:$0xff] %vm27, %v866
  %870 = vst.msk [vmem:[%s5] sm:$0xff] %vm27, %v866
  %872 = vrot.lane.b32.xlu0 %v857, 96
  %v873 = vpop.permute.xlu0 %872
  %875 = vst.msk [vmem:[%s6] sm:$0xff] %vm27, %v873
  // Predicated region
  $region18: #{rnn_model_forward.6} parent=0 // pred_check
    _
  $region19: #{rnn_model_forward.6} parent=0 // pred_check_branch
    %877 = sbr.rel (0) target = $region21
  $region20: #{rnn_model_forward.6} parent=0 // pred_region
    _
  $region21: #{rnn_model_forward.6} parent=0 // pred_fallthru
    _
  // Predicated region
  $region22: #{rnn_model_forward.6} parent=0 // pred_check
    _
  $region23: #{rnn_model_forward.6} parent=0 // pred_check_branch
    %879 = sbr.rel (0) target = $region25
  $region24: #{rnn_model_forward.6} parent=0 // pred_region
    _
  $region25: #{rnn_model_forward.6} parent=0 // pred_fallthru
    _
  // Predicated region
  $region26: #{rnn_model_forward.6} parent=0 // pred_check
    _
  $region27: #{rnn_model_forward.6} parent=0 // pred_check_branch
    %881 = sbr.rel (0) target = $region29
  $region28: #{rnn_model_forward.6} parent=0 // pred_region
    _
  $region29: #{rnn_model_forward.6} parent=0 // pred_fallthru
    _
  // Predicated region
  $region30: #{rnn_model_forward.6} parent=0 // pred_check
    _
  $region31: #{rnn_model_forward.6} parent=0 // pred_check_branch
    %883 = sbr.rel (0) target = $region33
  $region32: #{rnn_model_forward.6} parent=0 // pred_region
    _
  $region33: #{rnn_model_forward.6} parent=0 // pred_fallthru
    _
  // Predicated region
  $region34: #{rnn_model_forward.6} parent=0 // pred_check
    _
  $region35: #{rnn_model_forward.6} parent=0 // pred_check_branch
    %885 = sbr.rel (0) target = $region37
  $region36: #{rnn_model_forward.6} parent=0 // pred_region
    _
  $region37: #{rnn_model_forward.6} parent=0 // pred_fallthru
    _
  // Predicated region
  $region38: #{rnn_model_forward.6} parent=0 // pred_check
    _
  $region39: #{rnn_model_forward.6} parent=0 // pred_check_branch
    %887 = sbr.rel (0) target = $region41
  $region40: #{rnn_model_forward.6} parent=0 // pred_region
    _
  $region41: #{rnn_model_forward.6} parent=0 // pred_fallthru
    _

</llo_original>
